<compile_context>
chip_gen: v7x
topology: tpu7x:2x2x1
jax: 0.10.0
libtpu: 0.0.40
codegen_flags: <defaults>
</compile_context>

<pallas_src>
import functools

import jax
import jax.numpy as jnp
from jax.experimental import pallas as pl
from jax.experimental.pallas import tpu as pltpu

EPS = 1e-5  # nn.InstanceNorm2d default eps


def _content_sim_kernel(xa_ref, xb_ref, w_ref, m_ref, out_ref,
                        xpad_ref, patches_ref, *,
                        H, W, C, C_pad, C_out, NB, base):
    """Processes NB batch elements per grid step.

    xa_ref / xb_ref : (NB, C, H*W)     raw row-major flattened images (f32).
    w_ref           : (C_out, 9*C_pad) conv weight, taps x padded channels.
    m_ref           : (2, H*W)         edge masks (row0: w != 0, row1: w != W-1).
    out_ref         : (8, 128)         lane-dense partial sums of (f_a - f_b)^2.
    xpad_ref        : (2, C_pad, HWP)  VMEM scratch: zero-padded image slabs.
    patches_ref     : (9*C_pad, 2*HW)  VMEM scratch: in-VMEM im2col (a|b lanes).
    """
    HW = H * W
    inv_hw = jnp.float32(1.0 / HW)

    mask_l = m_ref[0:1, :]   # zeroes output columns at the left image edge
    mask_r = m_ref[1:2, :]   # zeroes output columns at the right image edge

    total = jnp.zeros((8, 128), jnp.float32)

    # Zero the padded scratch every step (borders + padded channel rows). The
    # data slab stores below overwrite the middle, so this is correct under
    # megacore grid sharding with no reliance on step-0 state. Cost is tiny.
    xpad_ref[...] = jnp.zeros_like(xpad_ref)

    for b in range(NB):                              # static batch-block loop
        # Zero-padded, channel-padded layout built in VMEM (no HBM copies).
        xpad_ref[0, 0:C, base:base + HW] = xa_ref[b]
        xpad_ref[1, 0:C, base:base + HW] = xb_ref[b]

        # In-VMEM im2col: write the 9 taps directly into the patches scratch
        # (no concatenates). Vertical taps come for free from the zero borders;
        # the two horizontal wrap cases use the precomputed resident masks.
        for dh in range(3):
            for dw in range(3):
                off = base + (dh - 1) * W + (dw - 1)   # static lane offset
                r0 = (dh * 3 + dw) * C_pad
                pa = xpad_ref[0, :, off:off + HW]       # (C_pad, HW)
                pb = xpad_ref[1, :, off:off + HW]
                if dw == 0:
                    pa = pa * mask_l
                    pb = pb * mask_l
                elif dw == 2:
                    pa = pa * mask_r
                    pb = pb * mask_r
                patches_ref[r0:r0 + C_pad, 0:HW] = pa
                patches_ref[r0:r0 + C_pad, HW:2 * HW] = pb

        # Both convolutions as one fused lane-dense MXU matmul.
        # TODO(synk): on v6e/v7x the MXU operands could be fed in bf16 to halve
        # the vreg footprint; kept f32 for exact parity with the reference.
        y = jnp.dot(w_ref[...], patches_ref[...],
                    preferred_element_type=jnp.float32)    # (C_out, 2*HW)
        ya = y[:, :HW]
        yb = y[:, HW:]

        def inorm_relu(t):
            # One-pass InstanceNorm2d stats over the spatial (lane) axis.
            mean = jnp.sum(t, axis=1, keepdims=True) * inv_hw
            ex2 = jnp.sum(t * t, axis=1, keepdims=True) * inv_hw
            var = ex2 - mean * mean
            return jnp.maximum((t - mean) * jax.lax.rsqrt(var + EPS), 0.0)

        d = inorm_relu(ya) - inorm_relu(yb)
        d2 = d * d                                          # (C_out, HW)

        # Channel fold on the otherwise idle MXU: (8, C_out) @ (C_out, HW).
        # The 1/8 scale cancels the 8 redundant rows when the caller sums them.
        fold = jnp.full((8, C_out), 0.125, dtype=jnp.float32)
        t8 = jnp.dot(fold, d2, preferred_element_type=jnp.float32)   # (8, HW)

        # Cheap aligned lane fold down to a single (8, 128) vreg tile.
        acc = t8[:, 0:128]
        for c0 in range(1, HW // 128):
            acc = acc + t8[:, 128 * c0:128 * (c0 + 1)]
        total = total + acc

    out_ref[...] = total


def content_similarity_loss(inp_a, inp_b, weight, bias=None, *, batch_block=1):
    """Equivalent of ContentSimilarityChecker.forward(inp_a, inp_b).

    `bias` is accepted for API parity with the PyTorch module but unused:
    InstanceNorm2d(affine=False) removes any per-channel pre-norm bias, so it
    cannot affect the loss.
    """
    del bias
    N, C, H, W = inp_a.shape
    C_out = weight.shape[0]
    HW = H * W
    assert HW % 128 == 0, "H*W must be a multiple of 128"
    assert C_out % 8 == 0, "C_out must be a multiple of 8"
    assert N % batch_block == 0, "batch_block must divide N"
    NB = batch_block

    C_pad = ((C + 7) // 8) * 8               # sublane-aligned channel groups
    K = 9 * C_pad
    base = ((W + 1 + 127) // 128) * 128      # 128-aligned start of the data slab
    HWP = ((base + HW + W + 1 + 127) // 128) * 128   # padded-slab lane extent

    # TODO(synk): for VGG-sized inputs (e.g. 224x224) the patches/y buffers no
    # longer fit scoped VMEM; add a spatial-tile grid axis with streaming
    # sum/sum-sq stats + a second normalize pass (tiles sized for v5e's 16 MiB
    # scoped VMEM) and set vmem_limit_bytes explicitly. Guard for now:
    assert 4 * (K + 3 * C_out) * 2 * HW < 24 * (1 << 20), \
        "TODO(synk): spatial tiling required for this problem size"

    # Free layout change only — no padded copies are materialized in HBM.
    xa = inp_a.reshape(N, C, HW).astype(jnp.float32)
    xb = inp_b.reshape(N, C, HW).astype(jnp.float32)

    # (C_out, C, 3, 3) -> (C_out, 9*C_pad); column k = (dh*3+dw)*C_pad + c.
    # Padded channel columns are exactly zero (match the zeroed scratch rows).
    w_r = jnp.transpose(weight.astype(jnp.float32), (2, 3, 1, 0))    # (3,3,C,Co)
    w_r = jnp.pad(w_r, ((0, 0), (0, 0), (0, C_pad - C), (0, 0)))
    w_t = jnp.transpose(w_r.reshape(K, C_out))                       # (C_out, K)

    # Horizontal-edge validity masks, computed once, kept resident in VMEM.
    col = jnp.arange(HW, dtype=jnp.int32) % W
    masks = jnp.stack([col != 0, col != W - 1]).astype(jnp.float32)  # (2, HW)

    kernel = functools.partial(
        _content_sim_kernel, H=H, W=W, C=C, C_pad=C_pad, C_out=C_out,
        NB=NB, base=base)

    partials = pl.pallas_call(
        kernel,
        out_shape=jax.ShapeDtypeStruct((N // NB, 8, 128), jnp.float32),
        grid=(N // NB,),
        in_specs=[
            pl.BlockSpec((NB, C, HW), lambda n: (n, 0, 0)),
            pl.BlockSpec((NB, C, HW), lambda n: (n, 0, 0)),
            pl.BlockSpec((C_out, K), lambda n: (0, 0)),
            pl.BlockSpec((2, HW), lambda n: (0, 0)),
        ],
        out_specs=pl.BlockSpec((None, 8, 128), lambda n: (n, 0, 0)),
        scratch_shapes=[
            pltpu.VMEM((2, C_pad, HWP), jnp.float32),
            pltpu.VMEM((K, 2 * HW), jnp.float32),
        ],
        compiler_params=pltpu.CompilerParams(
            dimension_semantics=("parallel",)),
    )(xa, xb, w_t, masks)

    # Final MSE mean (the in-kernel 1/8 fold scale cancels the 8 summed rows).
    return jnp.sum(partials) / jnp.float32(N * C_out * HW)


def reference_loss(inp_a, inp_b, weight, bias):
    """Pure-JAX reference (lax conv + bias + instance norm + relu + mse)."""
    def feat(x):
        y = jax.lax.conv_general_dilated(
            x, weight, window_strides=(1, 1), padding=((1, 1), (1, 1)),
            dimension_numbers=("NCHW", "OIHW", "NCHW"),
            precision=jax.lax.Precision.HIGHEST)
        y = y + bias.reshape(1, -1, 1, 1)
        mean = jnp.mean(y, axis=(2, 3), keepdims=True)
        var = jnp.mean((y - mean) ** 2, axis=(2, 3), keepdims=True)
        return jnp.maximum((y - mean) / jnp.sqrt(var + EPS), 0.0)
    fa, fb = feat(inp_a), feat(inp_b)
    return jnp.mean((fa - fb) ** 2)


if __name__ == "__main__":
    # VGG11 features[0] = Conv2d(3, 64, kernel_size=3, stride=1, padding=1)
    # TODO(synk): pretrained VGG weights are not loaded; deterministic synthetic init.
    key = jax.random.PRNGKey(0)
    k_a, k_b, k_w, k_bias = jax.random.split(key, 4)

    N, C_in, H, W = 2, 3, 16, 16
    C_out = 64

    inp_a = jax.random.normal(k_a, (N, C_in, H, W), dtype=jnp.float32)
    inp_b = jax.random.normal(k_b, (N, C_in, H, W), dtype=jnp.float32)
    weight = jax.random.normal(k_w, (C_out, C_in, 3, 3), dtype=jnp.float32) * 0.1
    bias = jax.random.normal(k_bias, (C_out,), dtype=jnp.float32) * 0.1

    ref = jax.block_until_ready(reference_loss(inp_a, inp_b, weight, bias))

    # batch_block=2 folds both batch elements into one grid step (amortizes
    # per-step overhead at tiny spatial sizes); batch_block=1 also exercises
    # the multi-step parallel grid path.
    for nb in (2, 1):
        loss = jax.block_until_ready(
            content_similarity_loss(inp_a, inp_b, weight, bias, batch_block=nb))
        assert jnp.allclose(loss, ref, rtol=2e-3, atol=1e-4), (nb, loss, ref)

    print("KERNEL_OK")
</pallas_src>

<mosaic_0001>
module attributes {stable_mosaic.version = 11 : i64} {
  func.func @_content_sim_kernel(%arg0: i32, %arg1: memref<2x3x256xf32, #tpu.memory_space<vmem>>, %arg2: memref<2x3x256xf32, #tpu.memory_space<vmem>>, %arg3: memref<64x72xf32, #tpu.memory_space<vmem>>, %arg4: memref<2x256xf32, #tpu.memory_space<vmem>>, %arg5: memref<1x8x128xf32, #tpu.memory_space<vmem>>, %arg6: memref<2x8x512xf32, #tpu.memory_space<vmem>>, %arg7: memref<72x512xf32, #tpu.memory_space<vmem>>) attributes {dimension_semantics = [#tpu.dimension_semantics<parallel>], iteration_bounds = array<i64: 1>, scalar_prefetch = 0 : i64, scratch_operands = 2 : i64, tpu.core_type = #tpu.core_type<tc>, window_params = [{transform_indices = @transform_0, window_bounds = array<i64: 2, 3, 256>}, {transform_indices = @transform_1, window_bounds = array<i64: 2, 3, 256>}, {pipeline_mode = #tpu.pipeline_mode<synchronous>, transform_indices = @transform_2, window_bounds = array<i64: 64, 72>}, {pipeline_mode = #tpu.pipeline_mode<synchronous>, transform_indices = @transform_3, window_bounds = array<i64: 2, 256>}, {transform_indices = @transform_4, window_bounds = array<i64: 1, 8, 128>}]} {
    %c0 = arith.constant 0 : index
    %c0_0 = arith.constant 0 : index
    %0 = vector.load %arg4[%c0, %c0_0] : memref<2x256xf32, #tpu.memory_space<vmem>>, vector<1x256xf32>
    %c1 = arith.constant 1 : index
    %c0_1 = arith.constant 0 : index
    %1 = vector.load %arg4[%c1, %c0_1] : memref<2x256xf32, #tpu.memory_space<vmem>>, vector<1x256xf32>
    %cst = arith.constant 0.000000e+00 : f32
    %2 = vector.broadcast %cst : f32 to vector<8x128xf32>
    %cst_2 = arith.constant 0.000000e+00 : f32
    %3 = vector.broadcast %cst_2 : f32 to vector<2x8x512xf32>
    %c0_3 = arith.constant 0 : index
    %c0_4 = arith.constant 0 : index
    %c0_5 = arith.constant 0 : index
    %4 = vector.load %arg6[%c0_3, %c0_4, %c0_5] : memref<2x8x512xf32, #tpu.memory_space<vmem>>, vector<2x8x512xf32>
    tpu.vector_store %arg6[%c0_3, %c0_4, %c0_5], %3 {strides = array<i32>} : memref<2x8x512xf32, #tpu.memory_space<vmem>>, vector<2x8x512xf32>,
    %c0_6 = arith.constant 0 : index
    %c0_7 = arith.constant 0 : index
    %c0_8 = arith.constant 0 : index
    %5 = vector.load %arg1[%c0_6, %c0_7, %c0_8] : memref<2x3x256xf32, #tpu.memory_space<vmem>>, vector<1x3x256xf32>
    %6 = vector.shape_cast %5 : vector<1x3x256xf32> to vector<3x256xf32>
    %c0_9 = arith.constant 0 : index
    %c0_10 = arith.constant 0 : index
    %c128 = arith.constant 128 : index
    %7 = vector.load %arg6[%c0_9, %c0_10, %c128] : memref<2x8x512xf32, #tpu.memory_space<vmem>>, vector<1x3x256xf32>
    %8 = vector.shape_cast %7 : vector<1x3x256xf32> to vector<3x256xf32>
    %9 = vector.shape_cast %6 : vector<3x256xf32> to vector<1x3x256xf32>
    tpu.vector_store %arg6[%c0_9, %c0_10, %c128], %9 {strides = array<i32>} : memref<2x8x512xf32, #tpu.memory_space<vmem>>, vector<1x3x256xf32>,
    %c0_11 = arith.constant 0 : index
    %c0_12 = arith.constant 0 : index
    %c0_13 = arith.constant 0 : index
    %10 = vector.load %arg2[%c0_11, %c0_12, %c0_13] : memref<2x3x256xf32, #tpu.memory_space<vmem>>, vector<1x3x256xf32>
    %11 = vector.shape_cast %10 : vector<1x3x256xf32> to vector<3x256xf32>
    %c1_14 = arith.constant 1 : index
    %c0_15 = arith.constant 0 : index
    %c128_16 = arith.constant 128 : index
    %12 = vector.load %arg6[%c1_14, %c0_15, %c128_16] : memref<2x8x512xf32, #tpu.memory_space<vmem>>, vector<1x3x256xf32>
    %13 = vector.shape_cast %12 : vector<1x3x256xf32> to vector<3x256xf32>
    %14 = vector.shape_cast %11 : vector<3x256xf32> to vector<1x3x256xf32>
    tpu.vector_store %arg6[%c1_14, %c0_15, %c128_16], %14 {strides = array<i32>} : memref<2x8x512xf32, #tpu.memory_space<vmem>>, vector<1x3x256xf32>,
    %c0_17 = arith.constant 0 : index
    %c0_18 = arith.constant 0 : index
    %c111 = arith.constant 111 : index
    %15 = vector.load %arg6[%c0_17, %c0_18, %c111] : memref<2x8x512xf32, #tpu.memory_space<vmem>>, vector<1x8x256xf32>
    %16 = vector.shape_cast %15 : vector<1x8x256xf32> to vector<8x256xf32>
    %c1_19 = arith.constant 1 : index
    %c0_20 = arith.constant 0 : index
    %c111_21 = arith.constant 111 : index
    %17 = vector.load %arg6[%c1_19, %c0_20, %c111_21] : memref<2x8x512xf32, #tpu.memory_space<vmem>>, vector<1x8x256xf32>
    %18 = vector.shape_cast %17 : vector<1x8x256xf32> to vector<8x256xf32>
    %19 = vector.broadcast %0 : vector<1x256xf32> to vector<8x256xf32>
    %20 = arith.mulf %16, %19 : vector<8x256xf32>
    %21 = vector.broadcast %0 : vector<1x256xf32> to vector<8x256xf32>
    %22 = arith.mulf %18, %21 : vector<8x256xf32>
    %c0_22 = arith.constant 0 : index
    %c0_23 = arith.constant 0 : index
    %23 = vector.load %arg7[%c0_22, %c0_23] : memref<72x512xf32, #tpu.memory_space<vmem>>, vector<8x256xf32>
    tpu.vector_store %arg7[%c0_22, %c0_23], %20 {strides = array<i32>} : memref<72x512xf32, #tpu.memory_space<vmem>>, vector<8x256xf32>,
    %c0_24 = arith.constant 0 : index
    %c256 = arith.constant 256 : index
    %24 = vector.load %arg7[%c0_24, %c256] : memref<72x512xf32, #tpu.memory_space<vmem>>, vector<8x256xf32>
    tpu.vector_store %arg7[%c0_24, %c256], %22 {strides = array<i32>} : memref<72x512xf32, #tpu.memory_space<vmem>>, vector<8x256xf32>,
    %c0_25 = arith.constant 0 : index
    %c0_26 = arith.constant 0 : index
    %c112 = arith.constant 112 : index
    %25 = vector.load %arg6[%c0_25, %c0_26, %c112] : memref<2x8x512xf32, #tpu.memory_space<vmem>>, vector<1x8x256xf32>
    %26 = vector.shape_cast %25 : vector<1x8x256xf32> to vector<8x256xf32>
    %c1_27 = arith.constant 1 : index
    %c0_28 = arith.constant 0 : index
    %c112_29 = arith.constant 112 : index
    %27 = vector.load %arg6[%c1_27, %c0_28, %c112_29] : memref<2x8x512xf32, #tpu.memory_space<vmem>>, vector<1x8x256xf32>
    %28 = vector.shape_cast %27 : vector<1x8x256xf32> to vector<8x256xf32>
    %c8 = arith.constant 8 : index
    %c0_30 = arith.constant 0 : index
    %29 = vector.load %arg7[%c8, %c0_30] : memref<72x512xf32, #tpu.memory_space<vmem>>, vector<8x256xf32>
    tpu.vector_store %arg7[%c8, %c0_30], %26 {strides = array<i32>} : memref<72x512xf32, #tpu.memory_space<vmem>>, vector<8x256xf32>,
    %c8_31 = arith.constant 8 : index
    %c256_32 = arith.constant 256 : index
    %30 = vector.load %arg7[%c8_31, %c256_32] : memref<72x512xf32, #tpu.memory_space<vmem>>, vector<8x256xf32>
    tpu.vector_store %arg7[%c8_31, %c256_32], %28 {strides = array<i32>} : memref<72x512xf32, #tpu.memory_space<vmem>>, vector<8x256xf32>,
    %c0_33 = arith.constant 0 : index
    %c0_34 = arith.constant 0 : index
    %c113 = arith.constant 113 : index
    %31 = vector.load %arg6[%c0_33, %c0_34, %c113] : memref<2x8x512xf32, #tpu.memory_space<vmem>>, vector<1x8x256xf32>
    %32 = vector.shape_cast %31 : vector<1x8x256xf32> to vector<8x256xf32>
    %c1_35 = arith.constant 1 : index
    %c0_36 = arith.constant 0 : index
    %c113_37 = arith.constant 113 : index
    %33 = vector.load %arg6[%c1_35, %c0_36, %c113_37] : memref<2x8x512xf32, #tpu.memory_space<vmem>>, vector<1x8x256xf32>
    %34 = vector.shape_cast %33 : vector<1x8x256xf32> to vector<8x256xf32>
    %35 = vector.broadcast %1 : vector<1x256xf32> to vector<8x256xf32>
    %36 = arith.mulf %32, %35 : vector<8x256xf32>
    %37 = vector.broadcast %1 : vector<1x256xf32> to vector<8x256xf32>
    %38 = arith.mulf %34, %37 : vector<8x256xf32>
    %c16 = arith.constant 16 : index
    %c0_38 = arith.constant 0 : index
    %39 = vector.load %arg7[%c16, %c0_38] : memref<72x512xf32, #tpu.memory_space<vmem>>, vector<8x256xf32>
    tpu.vector_store %arg7[%c16, %c0_38], %36 {strides = array<i32>} : memref<72x512xf32, #tpu.memory_space<vmem>>, vector<8x256xf32>,
    %c16_39 = arith.constant 16 : index
    %c256_40 = arith.constant 256 : index
    %40 = vector.load %arg7[%c16_39, %c256_40] : memref<72x512xf32, #tpu.memory_space<vmem>>, vector<8x256xf32>
    tpu.vector_store %arg7[%c16_39, %c256_40], %38 {strides = array<i32>} : memref<72x512xf32, #tpu.memory_space<vmem>>, vector<8x256xf32>,
    %c0_41 = arith.constant 0 : index
    %c0_42 = arith.constant 0 : index
    %c127 = arith.constant 127 : index
    %41 = vector.load %arg6[%c0_41, %c0_42, %c127] : memref<2x8x512xf32, #tpu.memory_space<vmem>>, vector<1x8x256xf32>
    %42 = vector.shape_cast %41 : vector<1x8x256xf32> to vector<8x256xf32>
    %c1_43 = arith.constant 1 : index
    %c0_44 = arith.constant 0 : index
    %c127_45 = arith.constant 127 : index
    %43 = vector.load %arg6[%c1_43, %c0_44, %c127_45] : memref<2x8x512xf32, #tpu.memory_space<vmem>>, vector<1x8x256xf32>
    %44 = vector.shape_cast %43 : vector<1x8x256xf32> to vector<8x256xf32>
    %45 = vector.broadcast %0 : vector<1x256xf32> to vector<8x256xf32>
    %46 = arith.mulf %42, %45 : vector<8x256xf32>
    %47 = vector.broadcast %0 : vector<1x256xf32> to vector<8x256xf32>
    %48 = arith.mulf %44, %47 : vector<8x256xf32>
    %c24 = arith.constant 24 : index
    %c0_46 = arith.constant 0 : index
    %49 = vector.load %arg7[%c24, %c0_46] : memref<72x512xf32, #tpu.memory_space<vmem>>, vector<8x256xf32>
    tpu.vector_store %arg7[%c24, %c0_46], %46 {strides = array<i32>} : memref<72x512xf32, #tpu.memory_space<vmem>>, vector<8x256xf32>,
    %c24_47 = arith.constant 24 : index
    %c256_48 = arith.constant 256 : index
    %50 = vector.load %arg7[%c24_47, %c256_48] : memref<72x512xf32, #tpu.memory_space<vmem>>, vector<8x256xf32>
    tpu.vector_store %arg7[%c24_47, %c256_48], %48 {strides = array<i32>} : memref<72x512xf32, #tpu.memory_space<vmem>>, vector<8x256xf32>,
    %c0_49 = arith.constant 0 : index
    %c0_50 = arith.constant 0 : index
    %c128_51 = arith.constant 128 : index
    %51 = vector.load %arg6[%c0_49, %c0_50, %c128_51] : memref<2x8x512xf32, #tpu.memory_space<vmem>>, vector<1x8x256xf32>
    %52 = vector.shape_cast %51 : vector<1x8x256xf32> to vector<8x256xf32>
    %c1_52 = arith.constant 1 : index
    %c0_53 = arith.constant 0 : index
    %c128_54 = arith.constant 128 : index
    %53 = vector.load %arg6[%c1_52, %c0_53, %c128_54] : memref<2x8x512xf32, #tpu.memory_space<vmem>>, vector<1x8x256xf32>
    %54 = vector.shape_cast %53 : vector<1x8x256xf32> to vector<8x256xf32>
    %c32 = arith.constant 32 : index
    %c0_55 = arith.constant 0 : index
    %55 = vector.load %arg7[%c32, %c0_55] : memref<72x512xf32, #tpu.memory_space<vmem>>, vector<8x256xf32>
    tpu.vector_store %arg7[%c32, %c0_55], %52 {strides = array<i32>} : memref<72x512xf32, #tpu.memory_space<vmem>>, vector<8x256xf32>,
    %c32_56 = arith.constant 32 : index
    %c256_57 = arith.constant 256 : index
    %56 = vector.load %arg7[%c32_56, %c256_57] : memref<72x512xf32, #tpu.memory_space<vmem>>, vector<8x256xf32>
    tpu.vector_store %arg7[%c32_56, %c256_57], %54 {strides = array<i32>} : memref<72x512xf32, #tpu.memory_space<vmem>>, vector<8x256xf32>,
    %c0_58 = arith.constant 0 : index
    %c0_59 = arith.constant 0 : index
    %c129 = arith.constant 129 : index
    %57 = vector.load %arg6[%c0_58, %c0_59, %c129] : memref<2x8x512xf32, #tpu.memory_space<vmem>>, vector<1x8x256xf32>
    %58 = vector.shape_cast %57 : vector<1x8x256xf32> to vector<8x256xf32>
    %c1_60 = arith.constant 1 : index
    %c0_61 = arith.constant 0 : index
    %c129_62 = arith.constant 129 : index
    %59 = vector.load %arg6[%c1_60, %c0_61, %c129_62] : memref<2x8x512xf32, #tpu.memory_space<vmem>>, vector<1x8x256xf32>
    %60 = vector.shape_cast %59 : vector<1x8x256xf32> to vector<8x256xf32>
    %61 = vector.broadcast %1 : vector<1x256xf32> to vector<8x256xf32>
    %62 = arith.mulf %58, %61 : vector<8x256xf32>
    %63 = vector.broadcast %1 : vector<1x256xf32> to vector<8x256xf32>
    %64 = arith.mulf %60, %63 : vector<8x256xf32>
    %c40 = arith.constant 40 : index
    %c0_63 = arith.constant 0 : index
    %65 = vector.load %arg7[%c40, %c0_63] : memref<72x512xf32, #tpu.memory_space<vmem>>, vector<8x256xf32>
    tpu.vector_store %arg7[%c40, %c0_63], %62 {strides = array<i32>} : memref<72x512xf32, #tpu.memory_space<vmem>>, vector<8x256xf32>,
    %c40_64 = arith.constant 40 : index
    %c256_65 = arith.constant 256 : index
    %66 = vector.load %arg7[%c40_64, %c256_65] : memref<72x512xf32, #tpu.memory_space<vmem>>, vector<8x256xf32>
    tpu.vector_store %arg7[%c40_64, %c256_65], %64 {strides = array<i32>} : memref<72x512xf32, #tpu.memory_space<vmem>>, vector<8x256xf32>,
    %c0_66 = arith.constant 0 : index
    %c0_67 = arith.constant 0 : index
    %c143 = arith.constant 143 : index
    %67 = vector.load %arg6[%c0_66, %c0_67, %c143] : memref<2x8x512xf32, #tpu.memory_space<vmem>>, vector<1x8x256xf32>
    %68 = vector.shape_cast %67 : vector<1x8x256xf32> to vector<8x256xf32>
    %c1_68 = arith.constant 1 : index
    %c0_69 = arith.constant 0 : index
    %c143_70 = arith.constant 143 : index
    %69 = vector.load %arg6[%c1_68, %c0_69, %c143_70] : memref<2x8x512xf32, #tpu.memory_space<vmem>>, vector<1x8x256xf32>
    %70 = vector.shape_cast %69 : vector<1x8x256xf32> to vector<8x256xf32>
    %71 = vector.broadcast %0 : vector<1x256xf32> to vector<8x256xf32>
    %72 = arith.mulf %68, %71 : vector<8x256xf32>
    %73 = vector.broadcast %0 : vector<1x256xf32> to vector<8x256xf32>
    %74 = arith.mulf %70, %73 : vector<8x256xf32>
    %c48 = arith.constant 48 : index
    %c0_71 = arith.constant 0 : index
    %75 = vector.load %arg7[%c48, %c0_71] : memref<72x512xf32, #tpu.memory_space<vmem>>, vector<8x256xf32>
    tpu.vector_store %arg7[%c48, %c0_71], %72 {strides = array<i32>} : memref<72x512xf32, #tpu.memory_space<vmem>>, vector<8x256xf32>,
    %c48_72 = arith.constant 48 : index
    %c256_73 = arith.constant 256 : index
    %76 = vector.load %arg7[%c48_72, %c256_73] : memref<72x512xf32, #tpu.memory_space<vmem>>, vector<8x256xf32>
    tpu.vector_store %arg7[%c48_72, %c256_73], %74 {strides = array<i32>} : memref<72x512xf32, #tpu.memory_space<vmem>>, vector<8x256xf32>,
    %c0_74 = arith.constant 0 : index
    %c0_75 = arith.constant 0 : index
    %c144 = arith.constant 144 : index
    %77 = vector.load %arg6[%c0_74, %c0_75, %c144] : memref<2x8x512xf32, #tpu.memory_space<vmem>>, vector<1x8x256xf32>
    %78 = vector.shape_cast %77 : vector<1x8x256xf32> to vector<8x256xf32>
    %c1_76 = arith.constant 1 : index
    %c0_77 = arith.constant 0 : index
    %c144_78 = arith.constant 144 : index
    %79 = vector.load %arg6[%c1_76, %c0_77, %c144_78] : memref<2x8x512xf32, #tpu.memory_space<vmem>>, vector<1x8x256xf32>
    %80 = vector.shape_cast %79 : vector<1x8x256xf32> to vector<8x256xf32>
    %c56 = arith.constant 56 : index
    %c0_79 = arith.constant 0 : index
    %81 = vector.load %arg7[%c56, %c0_79] : memref<72x512xf32, #tpu.memory_space<vmem>>, vector<8x256xf32>
    tpu.vector_store %arg7[%c56, %c0_79], %78 {strides = array<i32>} : memref<72x512xf32, #tpu.memory_space<vmem>>, vector<8x256xf32>,
    %c56_80 = arith.constant 56 : index
    %c256_81 = arith.constant 256 : index
    %82 = vector.load %arg7[%c56_80, %c256_81] : memref<72x512xf32, #tpu.memory_space<vmem>>, vector<8x256xf32>
    tpu.vector_store %arg7[%c56_80, %c256_81], %80 {strides = array<i32>} : memref<72x512xf32, #tpu.memory_space<vmem>>, vector<8x256xf32>,
    %c0_82 = arith.constant 0 : index
    %c0_83 = arith.constant 0 : index
    %c145 = arith.constant 145 : index
    %83 = vector.load %arg6[%c0_82, %c0_83, %c145] : memref<2x8x512xf32, #tpu.memory_space<vmem>>, vector<1x8x256xf32>
    %84 = vector.shape_cast %83 : vector<1x8x256xf32> to vector<8x256xf32>
    %c1_84 = arith.constant 1 : index
    %c0_85 = arith.constant 0 : index
    %c145_86 = arith.constant 145 : index
    %85 = vector.load %arg6[%c1_84, %c0_85, %c145_86] : memref<2x8x512xf32, #tpu.memory_space<vmem>>, vector<1x8x256xf32>
    %86 = vector.shape_cast %85 : vector<1x8x256xf32> to vector<8x256xf32>
    %87 = vector.broadcast %1 : vector<1x256xf32> to vector<8x256xf32>
    %88 = arith.mulf %84, %87 : vector<8x256xf32>
    %89 = vector.broadcast %1 : vector<1x256xf32> to vector<8x256xf32>
    %90 = arith.mulf %86, %89 : vector<8x256xf32>
    %c64 = arith.constant 64 : index
    %c0_87 = arith.constant 0 : index
    %91 = vector.load %arg7[%c64, %c0_87] : memref<72x512xf32, #tpu.memory_space<vmem>>, vector<8x256xf32>
    tpu.vector_store %arg7[%c64, %c0_87], %88 {strides = array<i32>} : memref<72x512xf32, #tpu.memory_space<vmem>>, vector<8x256xf32>,
    %c64_88 = arith.constant 64 : index
    %c256_89 = arith.constant 256 : index
    %92 = vector.load %arg7[%c64_88, %c256_89] : memref<72x512xf32, #tpu.memory_space<vmem>>, vector<8x256xf32>
    tpu.vector_store %arg7[%c64_88, %c256_89], %90 {strides = array<i32>} : memref<72x512xf32, #tpu.memory_space<vmem>>, vector<8x256xf32>,
    %c0_90 = arith.constant 0 : index
    %c0_91 = arith.constant 0 : index
    %93 = vector.load %arg3[%c0_90, %c0_91] : memref<64x72xf32, #tpu.memory_space<vmem>>, vector<64x72xf32>
    %c0_92 = arith.constant 0 : index
    %c0_93 = arith.constant 0 : index
    %94 = vector.load %arg7[%c0_92, %c0_93] : memref<72x512xf32, #tpu.memory_space<vmem>>, vector<72x512xf32>
    %cst_94 = arith.constant dense<0.000000e+00> : vector<64x512xf32>
    %95 = tpu.matmul %93, %94, %cst_94 {dimension_numbers = #tpu.dot_dimension_numbers<[1], [0], [0], [1], [0, 0, 1, 1], [], []>} : vector<64x72xf32>, vector<72x512xf32>, vector<64x512xf32> -> vector<64x512xf32>
    %96 = vector.extract_strided_slice %95 {offsets = [0, 0], sizes = [64, 256], strides = [1, 1]} : vector<64x512xf32> to vector<64x256xf32>
    %97 = vector.extract_strided_slice %95 {offsets = [0, 256], sizes = [64, 256], strides = [1, 1]} : vector<64x512xf32> to vector<64x256xf32>
    %cst_95 = arith.constant dense<0.000000e+00> : vector<64xf32>
    %98 = vector.multi_reduction <add>, %96, %cst_95 [1] : vector<64x256xf32> to vector<64xf32>
    %99 = vector.shape_cast %98 : vector<64xf32> to vector<64x1xf32>
    %cst_96 = arith.constant 3.906250e-03 : f32
    %100 = vector.broadcast %cst_96 : f32 to vector<64x1xf32>
    %101 = arith.mulf %99, %100 : vector<64x1xf32>
    %102 = arith.mulf %96, %96 : vector<64x256xf32>
    %cst_97 = arith.constant dense<0.000000e+00> : vector<64xf32>
    %103 = vector.multi_reduction <add>, %102, %cst_97 [1] : vector<64x256xf32> to vector<64xf32>
    %104 = vector.shape_cast %103 : vector<64xf32> to vector<64x1xf32>
    %cst_98 = arith.constant 3.906250e-03 : f32
    %105 = vector.broadcast %cst_98 : f32 to vector<64x1xf32>
    %106 = arith.mulf %104, %105 : vector<64x1xf32>
    %107 = arith.mulf %101, %101 : vector<64x1xf32>
    %108 = arith.subf %106, %107 : vector<64x1xf32>
    %109 = vector.broadcast %101 : vector<64x1xf32> to vector<64x256xf32>
    %110 = arith.subf %96, %109 : vector<64x256xf32>
    %cst_99 = arith.constant 9.99999974E-6 : f32
    %111 = vector.broadcast %cst_99 : f32 to vector<64x1xf32>
    %112 = arith.addf %108, %111 : vector<64x1xf32>
    %113 = math.rsqrt %112 : vector<64x1xf32>
    %114 = vector.broadcast %113 : vector<64x1xf32> to vector<64x256xf32>
    %115 = arith.mulf %110, %114 : vector<64x256xf32>
    %cst_100 = arith.constant 0.000000e+00 : f32
    %116 = vector.broadcast %cst_100 : f32 to vector<64x256xf32>
    %117 = arith.maximumf %115, %116 : vector<64x256xf32>
    %cst_101 = arith.constant dense<0.000000e+00> : vector<64xf32>
    %118 = vector.multi_reduction <add>, %97, %cst_101 [1] : vector<64x256xf32> to vector<64xf32>
    %119 = vector.shape_cast %118 : vector<64xf32> to vector<64x1xf32>
    %cst_102 = arith.constant 3.906250e-03 : f32
    %120 = vector.broadcast %cst_102 : f32 to vector<64x1xf32>
    %121 = arith.mulf %119, %120 : vector<64x1xf32>
    %122 = arith.mulf %97, %97 : vector<64x256xf32>
    %cst_103 = arith.constant dense<0.000000e+00> : vector<64xf32>
    %123 = vector.multi_reduction <add>, %122, %cst_103 [1] : vector<64x256xf32> to vector<64xf32>
    %124 = vector.shape_cast %123 : vector<64xf32> to vector<64x1xf32>
    %cst_104 = arith.constant 3.906250e-03 : f32
    %125 = vector.broadcast %cst_104 : f32 to vector<64x1xf32>
    %126 = arith.mulf %124, %125 : vector<64x1xf32>
    %127 = arith.mulf %121, %121 : vector<64x1xf32>
    %128 = arith.subf %126, %127 : vector<64x1xf32>
    %129 = vector.broadcast %121 : vector<64x1xf32> to vector<64x256xf32>
    %130 = arith.subf %97, %129 : vector<64x256xf32>
    %cst_105 = arith.constant 9.99999974E-6 : f32
    %131 = vector.broadcast %cst_105 : f32 to vector<64x1xf32>
    %132 = arith.addf %128, %131 : vector<64x1xf32>
    %133 = math.rsqrt %132 : vector<64x1xf32>
    %134 = vector.broadcast %133 : vector<64x1xf32> to vector<64x256xf32>
    %135 = arith.mulf %130, %134 : vector<64x256xf32>
    %cst_106 = arith.constant 0.000000e+00 : f32
    %136 = vector.broadcast %cst_106 : f32 to vector<64x256xf32>
    %137 = arith.maximumf %135, %136 : vector<64x256xf32>
    %138 = arith.subf %117, %137 : vector<64x256xf32>
    %139 = arith.mulf %138, %138 : vector<64x256xf32>
    %cst_107 = arith.constant 1.250000e-01 : f32
    %140 = vector.broadcast %cst_107 : f32 to vector<8x64xf32>
    %cst_108 = arith.constant dense<0.000000e+00> : vector<8x256xf32>
    %141 = tpu.matmul %140, %139, %cst_108 {dimension_numbers = #tpu.dot_dimension_numbers<[1], [0], [0], [1], [0, 0, 1, 1], [], []>} : vector<8x64xf32>, vector<64x256xf32>, vector<8x256xf32> -> vector<8x256xf32>
    %142 = vector.extract_strided_slice %141 {offsets = [0, 0], sizes = [8, 128], strides = [1, 1]} : vector<8x256xf32> to vector<8x128xf32>
    %143 = vector.extract_strided_slice %141 {offsets = [0, 128], sizes = [8, 128], strides = [1, 1]} : vector<8x256xf32> to vector<8x128xf32>
    %144 = arith.addf %142, %143 : vector<8x128xf32>
    %145 = arith.addf %2, %144 : vector<8x128xf32>
    %c1_109 = arith.constant 1 : index
    %c0_110 = arith.constant 0 : index
    %c0_111 = arith.constant 0 : index
    %146 = vector.load %arg1[%c1_109, %c0_110, %c0_111] : memref<2x3x256xf32, #tpu.memory_space<vmem>>, vector<1x3x256xf32>
    %147 = vector.shape_cast %146 : vector<1x3x256xf32> to vector<3x256xf32>
    %c0_112 = arith.constant 0 : index
    %c0_113 = arith.constant 0 : index
    %c128_114 = arith.constant 128 : index
    %148 = vector.load %arg6[%c0_112, %c0_113, %c128_114] : memref<2x8x512xf32, #tpu.memory_space<vmem>>, vector<1x3x256xf32>
    %149 = vector.shape_cast %148 : vector<1x3x256xf32> to vector<3x256xf32>
    %150 = vector.shape_cast %147 : vector<3x256xf32> to vector<1x3x256xf32>
    tpu.vector_store %arg6[%c0_112, %c0_113, %c128_114], %150 {strides = array<i32>} : memref<2x8x512xf32, #tpu.memory_space<vmem>>, vector<1x3x256xf32>,
    %c1_115 = arith.constant 1 : index
    %c0_116 = arith.constant 0 : index
    %c0_117 = arith.constant 0 : index
    %151 = vector.load %arg2[%c1_115, %c0_116, %c0_117] : memref<2x3x256xf32, #tpu.memory_space<vmem>>, vector<1x3x256xf32>
    %152 = vector.shape_cast %151 : vector<1x3x256xf32> to vector<3x256xf32>
    %c1_118 = arith.constant 1 : index
    %c0_119 = arith.constant 0 : index
    %c128_120 = arith.constant 128 : index
    %153 = vector.load %arg6[%c1_118, %c0_119, %c128_120] : memref<2x8x512xf32, #tpu.memory_space<vmem>>, vector<1x3x256xf32>
    %154 = vector.shape_cast %153 : vector<1x3x256xf32> to vector<3x256xf32>
    %155 = vector.shape_cast %152 : vector<3x256xf32> to vector<1x3x256xf32>
    tpu.vector_store %arg6[%c1_118, %c0_119, %c128_120], %155 {strides = array<i32>} : memref<2x8x512xf32, #tpu.memory_space<vmem>>, vector<1x3x256xf32>,
    %c0_121 = arith.constant 0 : index
    %c0_122 = arith.constant 0 : index
    %c111_123 = arith.constant 111 : index
    %156 = vector.load %arg6[%c0_121, %c0_122, %c111_123] : memref<2x8x512xf32, #tpu.memory_space<vmem>>, vector<1x8x256xf32>
    %157 = vector.shape_cast %156 : vector<1x8x256xf32> to vector<8x256xf32>
    %c1_124 = arith.constant 1 : index
    %c0_125 = arith.constant 0 : index
    %c111_126 = arith.constant 111 : index
    %158 = vector.load %arg6[%c1_124, %c0_125, %c111_126] : memref<2x8x512xf32, #tpu.memory_space<vmem>>, vector<1x8x256xf32>
    %159 = vector.shape_cast %158 : vector<1x8x256xf32> to vector<8x256xf32>
    %160 = vector.broadcast %0 : vector<1x256xf32> to vector<8x256xf32>
    %161 = arith.mulf %157, %160 : vector<8x256xf32>
    %162 = vector.broadcast %0 : vector<1x256xf32> to vector<8x256xf32>
    %163 = arith.mulf %159, %162 : vector<8x256xf32>
    %c0_127 = arith.constant 0 : index
    %c0_128 = arith.constant 0 : index
    %164 = vector.load %arg7[%c0_127, %c0_128] : memref<72x512xf32, #tpu.memory_space<vmem>>, vector<8x256xf32>
    tpu.vector_store %arg7[%c0_127, %c0_128], %161 {strides = array<i32>} : memref<72x512xf32, #tpu.memory_space<vmem>>, vector<8x256xf32>,
    %c0_129 = arith.constant 0 : index
    %c256_130 = arith.constant 256 : index
    %165 = vector.load %arg7[%c0_129, %c256_130] : memref<72x512xf32, #tpu.memory_space<vmem>>, vector<8x256xf32>
    tpu.vector_store %arg7[%c0_129, %c256_130], %163 {strides = array<i32>} : memref<72x512xf32, #tpu.memory_space<vmem>>, vector<8x256xf32>,
    %c0_131 = arith.constant 0 : index
    %c0_132 = arith.constant 0 : index
    %c112_133 = arith.constant 112 : index
    %166 = vector.load %arg6[%c0_131, %c0_132, %c112_133] : memref<2x8x512xf32, #tpu.memory_space<vmem>>, vector<1x8x256xf32>
    %167 = vector.shape_cast %166 : vector<1x8x256xf32> to vector<8x256xf32>
    %c1_134 = arith.constant 1 : index
    %c0_135 = arith.constant 0 : index
    %c112_136 = arith.constant 112 : index
    %168 = vector.load %arg6[%c1_134, %c0_135, %c112_136] : memref<2x8x512xf32, #tpu.memory_space<vmem>>, vector<1x8x256xf32>
    %169 = vector.shape_cast %168 : vector<1x8x256xf32> to vector<8x256xf32>
    %c8_137 = arith.constant 8 : index
    %c0_138 = arith.constant 0 : index
    %170 = vector.load %arg7[%c8_137, %c0_138] : memref<72x512xf32, #tpu.memory_space<vmem>>, vector<8x256xf32>
    tpu.vector_store %arg7[%c8_137, %c0_138], %167 {strides = array<i32>} : memref<72x512xf32, #tpu.memory_space<vmem>>, vector<8x256xf32>,
    %c8_139 = arith.constant 8 : index
    %c256_140 = arith.constant 256 : index
    %171 = vector.load %arg7[%c8_139, %c256_140] : memref<72x512xf32, #tpu.memory_space<vmem>>, vector<8x256xf32>
    tpu.vector_store %arg7[%c8_139, %c256_140], %169 {strides = array<i32>} : memref<72x512xf32, #tpu.memory_space<vmem>>, vector<8x256xf32>,
    %c0_141 = arith.constant 0 : index
    %c0_142 = arith.constant 0 : index
    %c113_143 = arith.constant 113 : index
    %172 = vector.load %arg6[%c0_141, %c0_142, %c113_143] : memref<2x8x512xf32, #tpu.memory_space<vmem>>, vector<1x8x256xf32>
    %173 = vector.shape_cast %172 : vector<1x8x256xf32> to vector<8x256xf32>
    %c1_144 = arith.constant 1 : index
    %c0_145 = arith.constant 0 : index
    %c113_146 = arith.constant 113 : index
    %174 = vector.load %arg6[%c1_144, %c0_145, %c113_146] : memref<2x8x512xf32, #tpu.memory_space<vmem>>, vector<1x8x256xf32>
    %175 = vector.shape_cast %174 : vector<1x8x256xf32> to vector<8x256xf32>
    %176 = vector.broadcast %1 : vector<1x256xf32> to vector<8x256xf32>
    %177 = arith.mulf %173, %176 : vector<8x256xf32>
    %178 = vector.broadcast %1 : vector<1x256xf32> to vector<8x256xf32>
    %179 = arith.mulf %175, %178 : vector<8x256xf32>
    %c16_147 = arith.constant 16 : index
    %c0_148 = arith.constant 0 : index
    %180 = vector.load %arg7[%c16_147, %c0_148] : memref<72x512xf32, #tpu.memory_space<vmem>>, vector<8x256xf32>
    tpu.vector_store %arg7[%c16_147, %c0_148], %177 {strides = array<i32>} : memref<72x512xf32, #tpu.memory_space<vmem>>, vector<8x256xf32>,
    %c16_149 = arith.constant 16 : index
    %c256_150 = arith.constant 256 : index
    %181 = vector.load %arg7[%c16_149, %c256_150] : memref<72x512xf32, #tpu.memory_space<vmem>>, vector<8x256xf32>
    tpu.vector_store %arg7[%c16_149, %c256_150], %179 {strides = array<i32>} : memref<72x512xf32, #tpu.memory_space<vmem>>, vector<8x256xf32>,
    %c0_151 = arith.constant 0 : index
    %c0_152 = arith.constant 0 : index
    %c127_153 = arith.constant 127 : index
    %182 = vector.load %arg6[%c0_151, %c0_152, %c127_153] : memref<2x8x512xf32, #tpu.memory_space<vmem>>, vector<1x8x256xf32>
    %183 = vector.shape_cast %182 : vector<1x8x256xf32> to vector<8x256xf32>
    %c1_154 = arith.constant 1 : index
    %c0_155 = arith.constant 0 : index
    %c127_156 = arith.constant 127 : index
    %184 = vector.load %arg6[%c1_154, %c0_155, %c127_156] : memref<2x8x512xf32, #tpu.memory_space<vmem>>, vector<1x8x256xf32>
    %185 = vector.shape_cast %184 : vector<1x8x256xf32> to vector<8x256xf32>
    %186 = vector.broadcast %0 : vector<1x256xf32> to vector<8x256xf32>
    %187 = arith.mulf %183, %186 : vector<8x256xf32>
    %188 = vector.broadcast %0 : vector<1x256xf32> to vector<8x256xf32>
    %189 = arith.mulf %185, %188 : vector<8x256xf32>
    %c24_157 = arith.constant 24 : index
    %c0_158 = arith.constant 0 : index
    %190 = vector.load %arg7[%c24_157, %c0_158] : memref<72x512xf32, #tpu.memory_space<vmem>>, vector<8x256xf32>
    tpu.vector_store %arg7[%c24_157, %c0_158], %187 {strides = array<i32>} : memref<72x512xf32, #tpu.memory_space<vmem>>, vector<8x256xf32>,
    %c24_159 = arith.constant 24 : index
    %c256_160 = arith.constant 256 : index
    %191 = vector.load %arg7[%c24_159, %c256_160] : memref<72x512xf32, #tpu.memory_space<vmem>>, vector<8x256xf32>
    tpu.vector_store %arg7[%c24_159, %c256_160], %189 {strides = array<i32>} : memref<72x512xf32, #tpu.memory_space<vmem>>, vector<8x256xf32>,
    %c0_161 = arith.constant 0 : index
    %c0_162 = arith.constant 0 : index
    %c128_163 = arith.constant 128 : index
    %192 = vector.load %arg6[%c0_161, %c0_162, %c128_163] : memref<2x8x512xf32, #tpu.memory_space<vmem>>, vector<1x8x256xf32>
    %193 = vector.shape_cast %192 : vector<1x8x256xf32> to vector<8x256xf32>
    %c1_164 = arith.constant 1 : index
    %c0_165 = arith.constant 0 : index
    %c128_166 = arith.constant 128 : index
    %194 = vector.load %arg6[%c1_164, %c0_165, %c128_166] : memref<2x8x512xf32, #tpu.memory_space<vmem>>, vector<1x8x256xf32>
    %195 = vector.shape_cast %194 : vector<1x8x256xf32> to vector<8x256xf32>
    %c32_167 = arith.constant 32 : index
    %c0_168 = arith.constant 0 : index
    %196 = vector.load %arg7[%c32_167, %c0_168] : memref<72x512xf32, #tpu.memory_space<vmem>>, vector<8x256xf32>
    tpu.vector_store %arg7[%c32_167, %c0_168], %193 {strides = array<i32>} : memref<72x512xf32, #tpu.memory_space<vmem>>, vector<8x256xf32>,
    %c32_169 = arith.constant 32 : index
    %c256_170 = arith.constant 256 : index
    %197 = vector.load %arg7[%c32_169, %c256_170] : memref<72x512xf32, #tpu.memory_space<vmem>>, vector<8x256xf32>
    tpu.vector_store %arg7[%c32_169, %c256_170], %195 {strides = array<i32>} : memref<72x512xf32, #tpu.memory_space<vmem>>, vector<8x256xf32>,
    %c0_171 = arith.constant 0 : index
    %c0_172 = arith.constant 0 : index
    %c129_173 = arith.constant 129 : index
    %198 = vector.load %arg6[%c0_171, %c0_172, %c129_173] : memref<2x8x512xf32, #tpu.memory_space<vmem>>, vector<1x8x256xf32>
    %199 = vector.shape_cast %198 : vector<1x8x256xf32> to vector<8x256xf32>
    %c1_174 = arith.constant 1 : index
    %c0_175 = arith.constant 0 : index
    %c129_176 = arith.constant 129 : index
    %200 = vector.load %arg6[%c1_174, %c0_175, %c129_176] : memref<2x8x512xf32, #tpu.memory_space<vmem>>, vector<1x8x256xf32>
    %201 = vector.shape_cast %200 : vector<1x8x256xf32> to vector<8x256xf32>
    %202 = vector.broadcast %1 : vector<1x256xf32> to vector<8x256xf32>
    %203 = arith.mulf %199, %202 : vector<8x256xf32>
    %204 = vector.broadcast %1 : vector<1x256xf32> to vector<8x256xf32>
    %205 = arith.mulf %201, %204 : vector<8x256xf32>
    %c40_177 = arith.constant 40 : index
    %c0_178 = arith.constant 0 : index
    %206 = vector.load %arg7[%c40_177, %c0_178] : memref<72x512xf32, #tpu.memory_space<vmem>>, vector<8x256xf32>
    tpu.vector_store %arg7[%c40_177, %c0_178], %203 {strides = array<i32>} : memref<72x512xf32, #tpu.memory_space<vmem>>, vector<8x256xf32>,
    %c40_179 = arith.constant 40 : index
    %c256_180 = arith.constant 256 : index
    %207 = vector.load %arg7[%c40_179, %c256_180] : memref<72x512xf32, #tpu.memory_space<vmem>>, vector<8x256xf32>
    tpu.vector_store %arg7[%c40_179, %c256_180], %205 {strides = array<i32>} : memref<72x512xf32, #tpu.memory_space<vmem>>, vector<8x256xf32>,
    %c0_181 = arith.constant 0 : index
    %c0_182 = arith.constant 0 : index
    %c143_183 = arith.constant 143 : index
    %208 = vector.load %arg6[%c0_181, %c0_182, %c143_183] : memref<2x8x512xf32, #tpu.memory_space<vmem>>, vector<1x8x256xf32>
    %209 = vector.shape_cast %208 : vector<1x8x256xf32> to vector<8x256xf32>
    %c1_184 = arith.constant 1 : index
    %c0_185 = arith.constant 0 : index
    %c143_186 = arith.constant 143 : index
    %210 = vector.load %arg6[%c1_184, %c0_185, %c143_186] : memref<2x8x512xf32, #tpu.memory_space<vmem>>, vector<1x8x256xf32>
    %211 = vector.shape_cast %210 : vector<1x8x256xf32> to vector<8x256xf32>
    %212 = vector.broadcast %0 : vector<1x256xf32> to vector<8x256xf32>
    %213 = arith.mulf %209, %212 : vector<8x256xf32>
    %214 = vector.broadcast %0 : vector<1x256xf32> to vector<8x256xf32>
    %215 = arith.mulf %211, %214 : vector<8x256xf32>
    %c48_187 = arith.constant 48 : index
    %c0_188 = arith.constant 0 : index
    %216 = vector.load %arg7[%c48_187, %c0_188] : memref<72x512xf32, #tpu.memory_space<vmem>>, vector<8x256xf32>
    tpu.vector_store %arg7[%c48_187, %c0_188], %213 {strides = array<i32>} : memref<72x512xf32, #tpu.memory_space<vmem>>, vector<8x256xf32>,
    %c48_189 = arith.constant 48 : index
    %c256_190 = arith.constant 256 : index
    %217 = vector.load %arg7[%c48_189, %c256_190] : memref<72x512xf32, #tpu.memory_space<vmem>>, vector<8x256xf32>
    tpu.vector_store %arg7[%c48_189, %c256_190], %215 {strides = array<i32>} : memref<72x512xf32, #tpu.memory_space<vmem>>, vector<8x256xf32>,
    %c0_191 = arith.constant 0 : index
    %c0_192 = arith.constant 0 : index
    %c144_193 = arith.constant 144 : index
    %218 = vector.load %arg6[%c0_191, %c0_192, %c144_193] : memref<2x8x512xf32, #tpu.memory_space<vmem>>, vector<1x8x256xf32>
    %219 = vector.shape_cast %218 : vector<1x8x256xf32> to vector<8x256xf32>
    %c1_194 = arith.constant 1 : index
    %c0_195 = arith.constant 0 : index
    %c144_196 = arith.constant 144 : index
    %220 = vector.load %arg6[%c1_194, %c0_195, %c144_196] : memref<2x8x512xf32, #tpu.memory_space<vmem>>, vector<1x8x256xf32>
    %221 = vector.shape_cast %220 : vector<1x8x256xf32> to vector<8x256xf32>
    %c56_197 = arith.constant 56 : index
    %c0_198 = arith.constant 0 : index
    %222 = vector.load %arg7[%c56_197, %c0_198] : memref<72x512xf32, #tpu.memory_space<vmem>>, vector<8x256xf32>
    tpu.vector_store %arg7[%c56_197, %c0_198], %219 {strides = array<i32>} : memref<72x512xf32, #tpu.memory_space<vmem>>, vector<8x256xf32>,
    %c56_199 = arith.constant 56 : index
    %c256_200 = arith.constant 256 : index
    %223 = vector.load %arg7[%c56_199, %c256_200] : memref<72x512xf32, #tpu.memory_space<vmem>>, vector<8x256xf32>
    tpu.vector_store %arg7[%c56_199, %c256_200], %221 {strides = array<i32>} : memref<72x512xf32, #tpu.memory_space<vmem>>, vector<8x256xf32>,
    %c0_201 = arith.constant 0 : index
    %c0_202 = arith.constant 0 : index
    %c145_203 = arith.constant 145 : index
    %224 = vector.load %arg6[%c0_201, %c0_202, %c145_203] : memref<2x8x512xf32, #tpu.memory_space<vmem>>, vector<1x8x256xf32>
    %225 = vector.shape_cast %224 : vector<1x8x256xf32> to vector<8x256xf32>
    %c1_204 = arith.constant 1 : index
    %c0_205 = arith.constant 0 : index
    %c145_206 = arith.constant 145 : index
    %226 = vector.load %arg6[%c1_204, %c0_205, %c145_206] : memref<2x8x512xf32, #tpu.memory_space<vmem>>, vector<1x8x256xf32>
    %227 = vector.shape_cast %226 : vector<1x8x256xf32> to vector<8x256xf32>
    %228 = vector.broadcast %1 : vector<1x256xf32> to vector<8x256xf32>
    %229 = arith.mulf %225, %228 : vector<8x256xf32>
    %230 = vector.broadcast %1 : vector<1x256xf32> to vector<8x256xf32>
    %231 = arith.mulf %227, %230 : vector<8x256xf32>
    %c64_207 = arith.constant 64 : index
    %c0_208 = arith.constant 0 : index
    %232 = vector.load %arg7[%c64_207, %c0_208] : memref<72x512xf32, #tpu.memory_space<vmem>>, vector<8x256xf32>
    tpu.vector_store %arg7[%c64_207, %c0_208], %229 {strides = array<i32>} : memref<72x512xf32, #tpu.memory_space<vmem>>, vector<8x256xf32>,
    %c64_209 = arith.constant 64 : index
    %c256_210 = arith.constant 256 : index
    %233 = vector.load %arg7[%c64_209, %c256_210] : memref<72x512xf32, #tpu.memory_space<vmem>>, vector<8x256xf32>
    tpu.vector_store %arg7[%c64_209, %c256_210], %231 {strides = array<i32>} : memref<72x512xf32, #tpu.memory_space<vmem>>, vector<8x256xf32>,
    %c0_211 = arith.constant 0 : index
    %c0_212 = arith.constant 0 : index
    %234 = vector.load %arg3[%c0_211, %c0_212] : memref<64x72xf32, #tpu.memory_space<vmem>>, vector<64x72xf32>
    %c0_213 = arith.constant 0 : index
    %c0_214 = arith.constant 0 : index
    %235 = vector.load %arg7[%c0_213, %c0_214] : memref<72x512xf32, #tpu.memory_space<vmem>>, vector<72x512xf32>
    %cst_215 = arith.constant dense<0.000000e+00> : vector<64x512xf32>
    %236 = tpu.matmul %234, %235, %cst_215 {dimension_numbers = #tpu.dot_dimension_numbers<[1], [0], [0], [1], [0, 0, 1, 1], [], []>} : vector<64x72xf32>, vector<72x512xf32>, vector<64x512xf32> -> vector<64x512xf32>
    %237 = vector.extract_strided_slice %236 {offsets = [0, 0], sizes = [64, 256], strides = [1, 1]} : vector<64x512xf32> to vector<64x256xf32>
    %238 = vector.extract_strided_slice %236 {offsets = [0, 256], sizes = [64, 256], strides = [1, 1]} : vector<64x512xf32> to vector<64x256xf32>
    %cst_216 = arith.constant dense<0.000000e+00> : vector<64xf32>
    %239 = vector.multi_reduction <add>, %237, %cst_216 [1] : vector<64x256xf32> to vector<64xf32>
    %240 = vector.shape_cast %239 : vector<64xf32> to vector<64x1xf32>
    %cst_217 = arith.constant 3.906250e-03 : f32
    %241 = vector.broadcast %cst_217 : f32 to vector<64x1xf32>
    %242 = arith.mulf %240, %241 : vector<64x1xf32>
    %243 = arith.mulf %237, %237 : vector<64x256xf32>
    %cst_218 = arith.constant dense<0.000000e+00> : vector<64xf32>
    %244 = vector.multi_reduction <add>, %243, %cst_218 [1] : vector<64x256xf32> to vector<64xf32>
    %245 = vector.shape_cast %244 : vector<64xf32> to vector<64x1xf32>
    %cst_219 = arith.constant 3.906250e-03 : f32
    %246 = vector.broadcast %cst_219 : f32 to vector<64x1xf32>
    %247 = arith.mulf %245, %246 : vector<64x1xf32>
    %248 = arith.mulf %242, %242 : vector<64x1xf32>
    %249 = arith.subf %247, %248 : vector<64x1xf32>
    %250 = vector.broadcast %242 : vector<64x1xf32> to vector<64x256xf32>
    %251 = arith.subf %237, %250 : vector<64x256xf32>
    %cst_220 = arith.constant 9.99999974E-6 : f32
    %252 = vector.broadcast %cst_220 : f32 to vector<64x1xf32>
    %253 = arith.addf %249, %252 : vector<64x1xf32>
    %254 = math.rsqrt %253 : vector<64x1xf32>
    %255 = vector.broadcast %254 : vector<64x1xf32> to vector<64x256xf32>
    %256 = arith.mulf %251, %255 : vector<64x256xf32>
    %cst_221 = arith.constant 0.000000e+00 : f32
    %257 = vector.broadcast %cst_221 : f32 to vector<64x256xf32>
    %258 = arith.maximumf %256, %257 : vector<64x256xf32>
    %cst_222 = arith.constant dense<0.000000e+00> : vector<64xf32>
    %259 = vector.multi_reduction <add>, %238, %cst_222 [1] : vector<64x256xf32> to vector<64xf32>
    %260 = vector.shape_cast %259 : vector<64xf32> to vector<64x1xf32>
    %cst_223 = arith.constant 3.906250e-03 : f32
    %261 = vector.broadcast %cst_223 : f32 to vector<64x1xf32>
    %262 = arith.mulf %260, %261 : vector<64x1xf32>
    %263 = arith.mulf %238, %238 : vector<64x256xf32>
    %cst_224 = arith.constant dense<0.000000e+00> : vector<64xf32>
    %264 = vector.multi_reduction <add>, %263, %cst_224 [1] : vector<64x256xf32> to vector<64xf32>
    %265 = vector.shape_cast %264 : vector<64xf32> to vector<64x1xf32>
    %cst_225 = arith.constant 3.906250e-03 : f32
    %266 = vector.broadcast %cst_225 : f32 to vector<64x1xf32>
    %267 = arith.mulf %265, %266 : vector<64x1xf32>
    %268 = arith.mulf %262, %262 : vector<64x1xf32>
    %269 = arith.subf %267, %268 : vector<64x1xf32>
    %270 = vector.broadcast %262 : vector<64x1xf32> to vector<64x256xf32>
    %271 = arith.subf %238, %270 : vector<64x256xf32>
    %cst_226 = arith.constant 9.99999974E-6 : f32
    %272 = vector.broadcast %cst_226 : f32 to vector<64x1xf32>
    %273 = arith.addf %269, %272 : vector<64x1xf32>
    %274 = math.rsqrt %273 : vector<64x1xf32>
    %275 = vector.broadcast %274 : vector<64x1xf32> to vector<64x256xf32>
    %276 = arith.mulf %271, %275 : vector<64x256xf32>
    %cst_227 = arith.constant 0.000000e+00 : f32
    %277 = vector.broadcast %cst_227 : f32 to vector<64x256xf32>
    %278 = arith.maximumf %276, %277 : vector<64x256xf32>
    %279 = arith.subf %258, %278 : vector<64x256xf32>
    %280 = arith.mulf %279, %279 : vector<64x256xf32>
    %cst_228 = arith.constant 1.250000e-01 : f32
    %281 = vector.broadcast %cst_228 : f32 to vector<8x64xf32>
    %cst_229 = arith.constant dense<0.000000e+00> : vector<8x256xf32>
    %282 = tpu.matmul %281, %280, %cst_229 {dimension_numbers = #tpu.dot_dimension_numbers<[1], [0], [0], [1], [0, 0, 1, 1], [], []>} : vector<8x64xf32>, vector<64x256xf32>, vector<8x256xf32> -> vector<8x256xf32>
    %283 = vector.extract_strided_slice %282 {offsets = [0, 0], sizes = [8, 128], strides = [1, 1]} : vector<8x256xf32> to vector<8x128xf32>
    %284 = vector.extract_strided_slice %282 {offsets = [0, 128], sizes = [8, 128], strides = [1, 1]} : vector<8x256xf32> to vector<8x128xf32>
    %285 = arith.addf %283, %284 : vector<8x128xf32>
    %286 = arith.addf %145, %285 : vector<8x128xf32>
    %c0_230 = arith.constant 0 : index
    %c0_231 = arith.constant 0 : index
    %c0_232 = arith.constant 0 : index
    %287 = vector.load %arg5[%c0_230, %c0_231, %c0_232] : memref<1x8x128xf32, #tpu.memory_space<vmem>>, vector<1x8x128xf32>
    %288 = vector.shape_cast %287 : vector<1x8x128xf32> to vector<8x128xf32>
    %289 = vector.shape_cast %286 : vector<8x128xf32> to vector<1x8x128xf32>
    tpu.vector_store %arg5[%c0_230, %c0_231, %c0_232], %289 {strides = array<i32>} : memref<1x8x128xf32, #tpu.memory_space<vmem>>, vector<1x8x128xf32>,
    return
  }
  func.func @transform_0(%arg0: i32) -> (i32, i32, i32) {
    %c0_i32 = arith.constant 0 : i32
    %c0_i32_0 = arith.constant 0 : i32
    %c0_i32_1 = arith.constant 0 : i32
    return %arg0, %c0_i32, %c0_i32_0 : i32, i32, i32
  }
  func.func @transform_1(%arg0: i32) -> (i32, i32, i32) {
    %c0_i32 = arith.constant 0 : i32
    %c0_i32_0 = arith.constant 0 : i32
    %c0_i32_1 = arith.constant 0 : i32
    return %arg0, %c0_i32, %c0_i32_0 : i32, i32, i32
  }
  func.func @transform_2(%arg0: i32) -> (i32, i32) {
    %c0_i32 = arith.constant 0 : i32
    %c0_i32_0 = arith.constant 0 : i32
    %c0_i32_1 = arith.constant 0 : i32
    return %c0_i32, %c0_i32_0 : i32, i32
  }
  func.func @transform_3(%arg0: i32) -> (i32, i32) {
    %c0_i32 = arith.constant 0 : i32
    %c0_i32_0 = arith.constant 0 : i32
    %c0_i32_1 = arith.constant 0 : i32
    return %c0_i32, %c0_i32_0 : i32, i32
  }
  func.func @transform_4(%arg0: i32) -> (i32, i32, i32) {
    %c0_i32 = arith.constant 0 : i32
    %c0_i32_0 = arith.constant 0 : i32
    %c0_i32_1 = arith.constant 0 : i32
    return %arg0, %c0_i32, %c0_i32_0 : i32, i32, i32
  }
}

</mosaic_0001>

<llo_original>
// kernel: tpu_custom_call.1
$region0: #{tpu_custom_call.1}
  #allocation0 [shape = 'u32[]', space=smem, size = 0x4, offset = 0x4, fixed_abs, tag = 'smem constant byte address 0x4 - core index']
  #allocation1 [shape = 'u32[144,128]{1,0:T(1,128)}', space=vmem, size = 0x12000, scoped, tag = 'internal scratch']
  #allocation2 [shape = 'f32[2,8,512]{2,1,0:T(8,128)}', space=vmem, size = 0x8000, scoped, tag = 'scratch operand']
  #allocation3 [shape = 'f32[72,512]{1,0:T(8,128)}', space=vmem, size = 0x24000, scoped, tag = 'scratch operand']
  %s0 = inlined_call_operand.vmem [shape: f32[2,3,256], index: 0, kind: input, shape index: {}]
  %s1 = inlined_call_operand.vmem [shape: f32[2,3,256], index: 1, kind: input, shape index: {}]
  %s2 = inlined_call_operand.hbm [shape: f32[64,72], index: 2, kind: input, shape index: {}]
  %s3 = inlined_call_operand.vmem [shape: f32[2,256], index: 3, kind: input, shape index: {}]
  %s4 = inlined_call_operand.hbm [shape: f32[1,8,128], index: 4, kind: output, shape index: {}]
  %s5 = sld [smem:[#allocation0]]
  $region30: #{tpu_custom_call.1} parent=0
    _
  %s7 = ssub.s32 1, %s5
  %s8 = scalar_select 0, %s7, %s5
  $region1: #{tpu_custom_call.1} parent=0
    #allocation4 [shape = 'u8[32768]{0}', space=vmem, size = 0x8000, scoped, tag = 'input window, operand 2, single buffered']
    #allocation5 [shape = 's32[1]{0}', space=sflag, size = 0x4, scoped, tag = 'scoped memory for tpu_custom_call.1']
    #allocation6 [shape = 's32[1]{0}', space=sflag, size = 0x4, scoped, tag = 'scoped memory for tpu_custom_call.1']
    #allocation7 [shape = 'u8[4096]{0}', space=vmem, size = 0x1000, scoped, tag = 'output window, operand 0, single buffered']
    %9 = vsyncpa [#allocation5], 0
    %10 = vsyncpa [#allocation6], 0
    // Predicated region
    $region2: #{tpu_custom_call.1} parent=1 // pred_check
      _
    $region3: #{tpu_custom_call.1} parent=1 // pred_check_branch
      %12 = sbr.rel (0) target = $region5
    $region4: #{tpu_custom_call.1} parent=1 // pred_region
      _
    $region5: #{tpu_custom_call.1} parent=1 // pred_fallthru
      _
    // Predicated region
    $region6: #{tpu_custom_call.1} parent=1 // pred_check
      _
    $region7: #{tpu_custom_call.1} parent=1 // pred_check_branch
      %14 = sbr.rel (0) target = $region9
    $region8: #{tpu_custom_call.1} parent=1 // pred_region
      _
    $region9: #{tpu_custom_call.1} parent=1 // pred_fallthru
      _
    // Predicated region
    $region10: #{tpu_custom_call.1} parent=1 // pred_check
      _
    $region11: #{tpu_custom_call.1} parent=1 // pred_check_branch
      %16 = sbr.rel (0) target = $region13
    $region12: #{tpu_custom_call.1} parent=1 // pred_region
      %s18 = ssub.s32 1024, 1024
      %19 = vsyncadd [#allocation5], %s18
      %s20 = sshll.u32 [#allocation4], 4
      %s21 = int_to_ptr.vmem [resolvable:$true] %s20
      %26 = dma.hbm_to_vmem [thread:$0]  %s2, 1024, %s21, [#allocation5], 128, 128, 8
    $region13: #{tpu_custom_call.1} parent=1 // pred_fallthru
      _
    // Predicated region
    $region14: #{tpu_custom_call.1} parent=1 // pred_check
      _
    $region15: #{tpu_custom_call.1} parent=1 // pred_check_branch
      %28 = sbr.rel (0) target = $region17
    $region16: #{tpu_custom_call.1} parent=1 // pred_region
      _
    $region17: #{tpu_custom_call.1} parent=1 // pred_fallthru
      _
    // Predicated region
    $region18: #{tpu_custom_call.1} parent=1 // pred_check
      _
    $region19: #{tpu_custom_call.1} parent=1 // pred_check_branch
      %30 = sbr.rel (0) target = $region21
    $region20: #{tpu_custom_call.1} parent=1 // pred_region
      %31 = dma.done [#allocation5], 1024
    $region21: #{tpu_custom_call.1} parent=1 // pred_fallthru
      _
    %v32 = vld [vmem:[%s3] ss:$2 sm:$0x3]
    %s33 = scalar_lea.vmem %s3, 1
    %v34 = vld [vmem:[%s33] ss:$2 sm:$0x3]
    %35 = vst [vmem:[#allocation2] sm:$0xff] 0.0
    %36 = vst [vmem:[#allocation2 + $0x8] sm:$0xff] 0.0
    %37 = vst [vmem:[#allocation2 + $0x10] sm:$0xff] 0.0
    %38 = vst [vmem:[#allocation2 + $0x18] sm:$0xff] 0.0
    %39 = vst [vmem:[#allocation2 + $0x20] sm:$0xff] 0.0
    %40 = vst [vmem:[#allocation2 + $0x28] sm:$0xff] 0.0
    %41 = vst [vmem:[#allocation2 + $0x30] sm:$0xff] 0.0
    %42 = vst [vmem:[#allocation2 + $0x38] sm:$0xff] 0.0
    %v43 = vld [vmem:[%s0] sm:$0x77]
    %v45 = vcombine.high %v43, %v43
    %47 = vst [vmem:[#allocation2 + $0x8] sm:$0x7] %v43
    %48 = vst [vmem:[#allocation2 + $0x10] sm:$0x7] %v45
    %v49 = vld [vmem:[%s1] sm:$0x77]
    %v51 = vcombine.high %v49, %v49
    %s53 = scalar_lea.vmem [#allocation2], 32
    %54 = vst [vmem:[%s53 + $0x8] sm:$0x7] %v49
    %55 = vst [vmem:[%s53 + $0x10] sm:$0x7] %v51
    %v56 = vld [vmem:[#allocation2] sm:$0xff]
    %v57 = vld [vmem:[#allocation2 + $0x8] sm:$0xff]
    %v58 = vld [vmem:[#allocation2 + $0x10] sm:$0xff]
    %v59 = vld [vmem:[%s53] sm:$0xff]
    %v60 = vld [vmem:[%s53 + $0x8] sm:$0xff]
    %v61 = vld [vmem:[%s53 + $0x10] sm:$0xff]
    %v63 = vlaneseq
    %v64 = vshrl.u32 %v63, 7
    %v65 = vsub.s32 0, %v64
    %v66 = vrot.slane %v32, %v65
    %v67 = vlaneseq
    %v68 = vshrl.u32 %v67, 7
    %v69 = vsub.s32 1, %v68
    %v70 = vrot.slane %v32, %v69
    %71 = vrot.lane.b32.xlu0 %v66, 111
    %v72 = vpop.permute.xlu0 %71
    %73 = vrot.lane.b32.xlu0 %v70, 111
    %v74 = vpop.permute.xlu0 %73
    %vm75 = vcmask 908288
    %v76 = vsel %vm75, %v72, %v74
    %v80 = vmul.f32 %v56, %v72
    %v81 = vmul.f32 %v57, %v76
    %v82 = vmul.f32 %v58, %v74
    %v83 = vmul.f32 %v59, %v72
    %v84 = vmul.f32 %v60, %v76
    %v85 = vmul.f32 %v61, %v74
    %89 = vrot.lane.b32.xlu0 %v80, 17
    %v90 = vpop.permute.xlu0 %89
    %91 = vrot.lane.b32.xlu0 %v81, 17
    %v92 = vpop.permute.xlu0 %91
    %93 = vrot.lane.b32.xlu0 %v82, 17
    %v94 = vpop.permute.xlu0 %93
    %vm95 = vcmask 138240
    %v96 = vsel %vm95, %v90, %v92
    %v97 = vsel %vm95, %v92, %v94
    %100 = vst [vmem:[#allocation3] sm:$0xff] %v96
    %101 = vst [vmem:[#allocation3 + $0x8] sm:$0xff] %v97
    %105 = vrot.lane.b32.xlu0 %v83, 17
    %v106 = vpop.permute.xlu0 %105
    %107 = vrot.lane.b32.xlu0 %v84, 17
    %v108 = vpop.permute.xlu0 %107
    %109 = vrot.lane.b32.xlu0 %v85, 17
    %v110 = vpop.permute.xlu0 %109
    %v111 = vsel %vm95, %v106, %v108
    %v112 = vsel %vm95, %v108, %v110
    %115 = vst [vmem:[#allocation3 + $0x10] sm:$0xff] %v111
    %116 = vst [vmem:[#allocation3 + $0x18] sm:$0xff] %v112
    %v117 = vld [vmem:[#allocation2] sm:$0xff]
    %v118 = vld [vmem:[#allocation2 + $0x8] sm:$0xff]
    %v119 = vld [vmem:[#allocation2 + $0x10] sm:$0xff]
    %v120 = vld [vmem:[%s53] sm:$0xff]
    %v121 = vld [vmem:[%s53 + $0x8] sm:$0xff]
    %v122 = vld [vmem:[%s53 + $0x10] sm:$0xff]
    %126 = vrot.lane.b32.xlu0 %v117, 16
    %v127 = vpop.permute.xlu0 %126
    %128 = vrot.lane.b32.xlu0 %v118, 16
    %v129 = vpop.permute.xlu0 %128
    %130 = vrot.lane.b32.xlu0 %v119, 16
    %v131 = vpop.permute.xlu0 %130
    %vm132 = vcmask 130048
    %v133 = vsel %vm132, %v127, %v129
    %v134 = vsel %vm132, %v129, %v131
    %137 = vst [vmem:[#allocation3 + $0x20] sm:$0xff] %v133
    %138 = vst [vmem:[#allocation3 + $0x28] sm:$0xff] %v134
    %142 = vrot.lane.b32.xlu0 %v120, 16
    %v143 = vpop.permute.xlu0 %142
    %144 = vrot.lane.b32.xlu0 %v121, 16
    %v145 = vpop.permute.xlu0 %144
    %146 = vrot.lane.b32.xlu0 %v122, 16
    %v147 = vpop.permute.xlu0 %146
    %v148 = vsel %vm132, %v143, %v145
    %v149 = vsel %vm132, %v145, %v147
    %152 = vst [vmem:[#allocation3 + $0x30] sm:$0xff] %v148
    %153 = vst [vmem:[#allocation3 + $0x38] sm:$0xff] %v149
    %v154 = vld [vmem:[#allocation2] sm:$0xff]
    %v155 = vld [vmem:[#allocation2 + $0x8] sm:$0xff]
    %v156 = vld [vmem:[#allocation2 + $0x10] sm:$0xff]
    %v157 = vld [vmem:[%s53] sm:$0xff]
    %v158 = vld [vmem:[%s53 + $0x8] sm:$0xff]
    %v159 = vld [vmem:[%s53 + $0x10] sm:$0xff]
    %v161 = vlaneseq
    %v162 = vshrl.u32 %v161, 7
    %v163 = vsub.s32 0, %v162
    %v164 = vrot.slane %v34, %v163
    %v165 = vlaneseq
    %v166 = vshrl.u32 %v165, 7
    %v167 = vsub.s32 1, %v166
    %v168 = vrot.slane %v34, %v167
    %169 = vrot.lane.b32.xlu0 %v164, 113
    %v170 = vpop.permute.xlu0 %169
    %171 = vrot.lane.b32.xlu0 %v168, 113
    %v172 = vpop.permute.xlu0 %171
    %vm173 = vcmask 924672
    %v174 = vsel %vm173, %v170, %v172
    %v178 = vmul.f32 %v154, %v170
    %v179 = vmul.f32 %v155, %v174
    %v180 = vmul.f32 %v156, %v172
    %v181 = vmul.f32 %v157, %v170
    %v182 = vmul.f32 %v158, %v174
    %v183 = vmul.f32 %v159, %v172
    %187 = vrot.lane.b32.xlu0 %v178, 15
    %v188 = vpop.permute.xlu0 %187
    %189 = vrot.lane.b32.xlu0 %v179, 15
    %v190 = vpop.permute.xlu0 %189
    %191 = vrot.lane.b32.xlu0 %v180, 15
    %v192 = vpop.permute.xlu0 %191
    %vm193 = vcmask 121856
    %v194 = vsel %vm193, %v188, %v190
    %v195 = vsel %vm193, %v190, %v192
    %198 = vst [vmem:[#allocation3 + $0x40] sm:$0xff] %v194
    %199 = vst [vmem:[#allocation3 + $0x48] sm:$0xff] %v195
    %203 = vrot.lane.b32.xlu0 %v181, 15
    %v204 = vpop.permute.xlu0 %203
    %205 = vrot.lane.b32.xlu0 %v182, 15
    %v206 = vpop.permute.xlu0 %205
    %207 = vrot.lane.b32.xlu0 %v183, 15
    %v208 = vpop.permute.xlu0 %207
    %v209 = vsel %vm193, %v204, %v206
    %v210 = vsel %vm193, %v206, %v208
    %213 = vst [vmem:[#allocation3 + $0x50] sm:$0xff] %v209
    %214 = vst [vmem:[#allocation3 + $0x58] sm:$0xff] %v210
    %v215 = vld [vmem:[#allocation2] sm:$0xff]
    %v216 = vld [vmem:[#allocation2 + $0x8] sm:$0xff]
    %v217 = vld [vmem:[#allocation2 + $0x10] sm:$0xff]
    %v218 = vld [vmem:[%s53] sm:$0xff]
    %v219 = vld [vmem:[%s53 + $0x8] sm:$0xff]
    %v220 = vld [vmem:[%s53 + $0x10] sm:$0xff]
    %221 = vrot.lane.b32.xlu0 %v66, 127
    %v222 = vpop.permute.xlu0 %221
    %223 = vrot.lane.b32.xlu0 %v70, 127
    %v224 = vpop.permute.xlu0 %223
    %vm225 = vcmask 1039360
    %v226 = vsel %vm225, %v222, %v224
    %v230 = vmul.f32 %v215, %v222
    %v231 = vmul.f32 %v216, %v226
    %v232 = vmul.f32 %v217, %v224
    %v233 = vmul.f32 %v218, %v222
    %v234 = vmul.f32 %v219, %v226
    %v235 = vmul.f32 %v220, %v224
    %239 = vrot.lane.b32.xlu0 %v230, 1
    %v240 = vpop.permute.xlu0 %239
    %241 = vrot.lane.b32.xlu0 %v231, 1
    %v242 = vpop.permute.xlu0 %241
    %243 = vrot.lane.b32.xlu0 %v232, 1
    %v244 = vpop.permute.xlu0 %243
    %vm245 = vcmask 7168
    %v246 = vsel %vm245, %v240, %v242
    %v247 = vsel %vm245, %v242, %v244
    %250 = vst [vmem:[#allocation3 + $0x60] sm:$0xff] %v246
    %251 = vst [vmem:[#allocation3 + $0x68] sm:$0xff] %v247
    %255 = vrot.lane.b32.xlu0 %v233, 1
    %v256 = vpop.permute.xlu0 %255
    %257 = vrot.lane.b32.xlu0 %v234, 1
    %v258 = vpop.permute.xlu0 %257
    %259 = vrot.lane.b32.xlu0 %v235, 1
    %v260 = vpop.permute.xlu0 %259
    %v261 = vsel %vm245, %v256, %v258
    %v262 = vsel %vm245, %v258, %v260
    %265 = vst [vmem:[#allocation3 + $0x70] sm:$0xff] %v261
    %266 = vst [vmem:[#allocation3 + $0x78] sm:$0xff] %v262
    %v267 = vld [vmem:[#allocation2 + $0x8] sm:$0xff]
    %v268 = vld [vmem:[#allocation2 + $0x10] sm:$0xff]
    %v269 = vld [vmem:[%s53 + $0x8] sm:$0xff]
    %v270 = vld [vmem:[%s53 + $0x10] sm:$0xff]
    %271 = vst [vmem:[#allocation3 + $0x80] sm:$0xff] %v267
    %272 = vst [vmem:[#allocation3 + $0x88] sm:$0xff] %v268
    %273 = vst [vmem:[#allocation3 + $0x90] sm:$0xff] %v269
    %274 = vst [vmem:[#allocation3 + $0x98] sm:$0xff] %v270
    %v275 = vld [vmem:[#allocation2 + $0x8] sm:$0xff]
    %v276 = vld [vmem:[#allocation2 + $0x10] sm:$0xff]
    %v277 = vld [vmem:[#allocation2 + $0x18] sm:$0xff]
    %v278 = vld [vmem:[%s53 + $0x8] sm:$0xff]
    %v279 = vld [vmem:[%s53 + $0x10] sm:$0xff]
    %v280 = vld [vmem:[%s53 + $0x18] sm:$0xff]
    %281 = vrot.lane.b32.xlu0 %v164, 1
    %v282 = vpop.permute.xlu0 %281
    %283 = vrot.lane.b32.xlu0 %v168, 1
    %v284 = vpop.permute.xlu0 %283
    %v285 = vsel %vm245, %v282, %v284
    %v289 = vmul.f32 %v275, %v282
    %v290 = vmul.f32 %v276, %v285
    %v291 = vmul.f32 %v277, %v284
    %v292 = vmul.f32 %v278, %v282
    %v293 = vmul.f32 %v279, %v285
    %v294 = vmul.f32 %v280, %v284
    %298 = vrot.lane.b32.xlu0 %v289, 127
    %v299 = vpop.permute.xlu0 %298
    %300 = vrot.lane.b32.xlu0 %v290, 127
    %v301 = vpop.permute.xlu0 %300
    %302 = vrot.lane.b32.xlu0 %v291, 127
    %v303 = vpop.permute.xlu0 %302
    %v304 = vsel %vm225, %v299, %v301
    %v305 = vsel %vm225, %v301, %v303
    %308 = vst [vmem:[#allocation3 + $0xa0] sm:$0xff] %v304
    %309 = vst [vmem:[#allocation3 + $0xa8] sm:$0xff] %v305
    %313 = vrot.lane.b32.xlu0 %v292, 127
    %v314 = vpop.permute.xlu0 %313
    %315 = vrot.lane.b32.xlu0 %v293, 127
    %v316 = vpop.permute.xlu0 %315
    %317 = vrot.lane.b32.xlu0 %v294, 127
    %v318 = vpop.permute.xlu0 %317
    %v319 = vsel %vm225, %v314, %v316
    %v320 = vsel %vm225, %v316, %v318
    %323 = vst [vmem:[#allocation3 + $0xb0] sm:$0xff] %v319
    %324 = vst [vmem:[#allocation3 + $0xb8] sm:$0xff] %v320
    %v325 = vld [vmem:[#allocation2 + $0x8] sm:$0xff]
    %v326 = vld [vmem:[#allocation2 + $0x10] sm:$0xff]
    %v327 = vld [vmem:[#allocation2 + $0x18] sm:$0xff]
    %v328 = vld [vmem:[%s53 + $0x8] sm:$0xff]
    %v329 = vld [vmem:[%s53 + $0x10] sm:$0xff]
    %v330 = vld [vmem:[%s53 + $0x18] sm:$0xff]
    %331 = vrot.lane.b32.xlu0 %v66, 15
    %v332 = vpop.permute.xlu0 %331
    %333 = vrot.lane.b32.xlu0 %v70, 15
    %v334 = vpop.permute.xlu0 %333
    %v335 = vsel %vm193, %v332, %v334
    %v339 = vmul.f32 %v325, %v332
    %v340 = vmul.f32 %v326, %v335
    %v341 = vmul.f32 %v327, %v334
    %v342 = vmul.f32 %v328, %v332
    %v343 = vmul.f32 %v329, %v335
    %v344 = vmul.f32 %v330, %v334
    %348 = vrot.lane.b32.xlu0 %v339, 113
    %v349 = vpop.permute.xlu0 %348
    %350 = vrot.lane.b32.xlu0 %v340, 113
    %v351 = vpop.permute.xlu0 %350
    %352 = vrot.lane.b32.xlu0 %v341, 113
    %v353 = vpop.permute.xlu0 %352
    %v354 = vsel %vm173, %v349, %v351
    %v355 = vsel %vm173, %v351, %v353
    %358 = vst [vmem:[#allocation3 + $0xc0] sm:$0xff] %v354
    %359 = vst [vmem:[#allocation3 + $0xc8] sm:$0xff] %v355
    %363 = vrot.lane.b32.xlu0 %v342, 113
    %v364 = vpop.permute.xlu0 %363
    %365 = vrot.lane.b32.xlu0 %v343, 113
    %v366 = vpop.permute.xlu0 %365
    %367 = vrot.lane.b32.xlu0 %v344, 113
    %v368 = vpop.permute.xlu0 %367
    %v369 = vsel %vm173, %v364, %v366
    %v370 = vsel %vm173, %v366, %v368
    %373 = vst [vmem:[#allocation3 + $0xd0] sm:$0xff] %v369
    %374 = vst [vmem:[#allocation3 + $0xd8] sm:$0xff] %v370
    %v375 = vld [vmem:[#allocation2 + $0x8] sm:$0xff]
    %v376 = vld [vmem:[#allocation2 + $0x10] sm:$0xff]
    %v377 = vld [vmem:[#allocation2 + $0x18] sm:$0xff]
    %v378 = vld [vmem:[%s53 + $0x8] sm:$0xff]
    %v379 = vld [vmem:[%s53 + $0x10] sm:$0xff]
    %v380 = vld [vmem:[%s53 + $0x18] sm:$0xff]
    %384 = vrot.lane.b32.xlu0 %v375, 112
    %v385 = vpop.permute.xlu0 %384
    %386 = vrot.lane.b32.xlu0 %v376, 112
    %v387 = vpop.permute.xlu0 %386
    %388 = vrot.lane.b32.xlu0 %v377, 112
    %v389 = vpop.permute.xlu0 %388
    %vm390 = vcmask 916480
    %v391 = vsel %vm390, %v385, %v387
    %v392 = vsel %vm390, %v387, %v389
    %395 = vst [vmem:[#allocation3 + $0xe0] sm:$0xff] %v391
    %396 = vst [vmem:[#allocation3 + $0xe8] sm:$0xff] %v392
    %400 = vrot.lane.b32.xlu0 %v378, 112
    %v401 = vpop.permute.xlu0 %400
    %402 = vrot.lane.b32.xlu0 %v379, 112
    %v403 = vpop.permute.xlu0 %402
    %404 = vrot.lane.b32.xlu0 %v380, 112
    %v405 = vpop.permute.xlu0 %404
    %v406 = vsel %vm390, %v401, %v403
    %v407 = vsel %vm390, %v403, %v405
    %410 = vst [vmem:[#allocation3 + $0xf0] sm:$0xff] %v406
    %411 = vst [vmem:[#allocation3 + $0xf8] sm:$0xff] %v407
    %v412 = vld [vmem:[#allocation2 + $0x8] sm:$0xff]
    %v413 = vld [vmem:[#allocation2 + $0x10] sm:$0xff]
    %v414 = vld [vmem:[#allocation2 + $0x18] sm:$0xff]
    %v415 = vld [vmem:[%s53 + $0x8] sm:$0xff]
    %v416 = vld [vmem:[%s53 + $0x10] sm:$0xff]
    %v417 = vld [vmem:[%s53 + $0x18] sm:$0xff]
    %418 = vrot.lane.b32.xlu0 %v164, 17
    %v419 = vpop.permute.xlu0 %418
    %420 = vrot.lane.b32.xlu0 %v168, 17
    %v421 = vpop.permute.xlu0 %420
    %v422 = vsel %vm95, %v419, %v421
    %v426 = vmul.f32 %v412, %v419
    %v427 = vmul.f32 %v413, %v422
    %v428 = vmul.f32 %v414, %v421
    %v429 = vmul.f32 %v415, %v419
    %v430 = vmul.f32 %v416, %v422
    %v431 = vmul.f32 %v417, %v421
    %435 = vrot.lane.b32.xlu0 %v426, 111
    %v436 = vpop.permute.xlu0 %435
    %437 = vrot.lane.b32.xlu0 %v427, 111
    %v438 = vpop.permute.xlu0 %437
    %439 = vrot.lane.b32.xlu0 %v428, 111
    %v440 = vpop.permute.xlu0 %439
    %v441 = vsel %vm75, %v436, %v438
    %v442 = vsel %vm75, %v438, %v440
    %445 = vst [vmem:[#allocation3 + $0x100] sm:$0xff] %v441
    %446 = vst [vmem:[#allocation3 + $0x108] sm:$0xff] %v442
    %450 = vrot.lane.b32.xlu0 %v429, 111
    %v451 = vpop.permute.xlu0 %450
    %452 = vrot.lane.b32.xlu0 %v430, 111
    %v453 = vpop.permute.xlu0 %452
    %454 = vrot.lane.b32.xlu0 %v431, 111
    %v455 = vpop.permute.xlu0 %454
    %v456 = vsel %vm75, %v451, %v453
    %v457 = vsel %vm75, %v453, %v455
    %460 = vst [vmem:[#allocation3 + $0x110] sm:$0xff] %v456
    %461 = vst [vmem:[#allocation3 + $0x118] sm:$0xff] %v457
    %v462 = vld [vmem:[#allocation4] sm:$0xff]
    %v463 = vld [vmem:[#allocation4 + $0x8] sm:$0xff]
    %v464 = vld [vmem:[#allocation4 + $0x10] sm:$0xff]
    %v465 = vld [vmem:[#allocation4 + $0x18] sm:$0xff]
    %v466 = vld [vmem:[#allocation4 + $0x20] sm:$0xff]
    %v467 = vld [vmem:[#allocation4 + $0x28] sm:$0xff]
    %v468 = vld [vmem:[#allocation4 + $0x30] sm:$0xff]
    %v469 = vld [vmem:[#allocation4 + $0x38] sm:$0xff]
    %v470 = vld [vmem:[#allocation3] sm:$0xff]
    %v471 = vld [vmem:[#allocation3 + $0x8] sm:$0xff]
    %v472 = vld [vmem:[#allocation3 + $0x10] sm:$0xff]
    %v473 = vld [vmem:[#allocation3 + $0x18] sm:$0xff]
    %v474 = vld [vmem:[#allocation3 + $0x20] sm:$0xff]
    %v475 = vld [vmem:[#allocation3 + $0x28] sm:$0xff]
    %v476 = vld [vmem:[#allocation3 + $0x30] sm:$0xff]
    %v477 = vld [vmem:[#allocation3 + $0x38] sm:$0xff]
    %v478 = vld [vmem:[#allocation3 + $0x40] sm:$0xff]
    %v479 = vld [vmem:[#allocation3 + $0x48] sm:$0xff]
    %v480 = vld [vmem:[#allocation3 + $0x50] sm:$0xff]
    %v481 = vld [vmem:[#allocation3 + $0x58] sm:$0xff]
    %v482 = vld [vmem:[#allocation3 + $0x60] sm:$0xff]
    %v483 = vld [vmem:[#allocation3 + $0x68] sm:$0xff]
    %v484 = vld [vmem:[#allocation3 + $0x70] sm:$0xff]
    %v485 = vld [vmem:[#allocation3 + $0x78] sm:$0xff]
    %v486 = vld [vmem:[#allocation3 + $0x80] sm:$0xff]
    %v487 = vld [vmem:[#allocation3 + $0x88] sm:$0xff]
    %v488 = vld [vmem:[#allocation3 + $0x90] sm:$0xff]
    %v489 = vld [vmem:[#allocation3 + $0x98] sm:$0xff]
    %v490 = vld [vmem:[#allocation3 + $0xa0] sm:$0xff]
    %v491 = vld [vmem:[#allocation3 + $0xa8] sm:$0xff]
    %v492 = vld [vmem:[#allocation3 + $0xb0] sm:$0xff]
    %v493 = vld [vmem:[#allocation3 + $0xb8] sm:$0xff]
    %v494 = vld [vmem:[#allocation3 + $0xc0] sm:$0xff]
    %v495 = vld [vmem:[#allocation3 + $0xc8] sm:$0xff]
    %v496 = vld [vmem:[#allocation3 + $0xd0] sm:$0xff]
    %v497 = vld [vmem:[#allocation3 + $0xd8] sm:$0xff]
    %v498 = vld [vmem:[#allocation3 + $0xe0] sm:$0xff]
    %v499 = vld [vmem:[#allocation3 + $0xe8] sm:$0xff]
    %v500 = vld [vmem:[#allocation3 + $0xf0] sm:$0xff]
    %v501 = vld [vmem:[#allocation3 + $0xf8] sm:$0xff]
    %v502 = vld [vmem:[#allocation3 + $0x100] sm:$0xff]
    %v503 = vld [vmem:[#allocation3 + $0x108] sm:$0xff]
    %v504 = vld [vmem:[#allocation3 + $0x110] sm:$0xff]
    %v505 = vld [vmem:[#allocation3 + $0x118] sm:$0xff]
    %vm506 = vcmask 588800
    %v508 = vsel %vm506, %v462, 0
    %v511 = vsel %vm506, %v463, 0
    %v514 = vsel %vm506, %v464, 0
    %v517 = vsel %vm506, %v465, 0
    %v520 = vsel %vm506, %v466, 0
    %v523 = vsel %vm506, %v467, 0
    %v526 = vsel %vm506, %v468, 0
    %v529 = vsel %vm506, %v469, 0
    %531 = vmatprep.subr.mxu0 %v471
    %532 = vmatpush1.msra.mxu0 %v470
    %533 = vmatprep.subr.mxu0 %v475
    %534 = vmatpush1.msra.mxu0 %v474
    %535 = vmatprep.subr.mxu0 %v479
    %536 = vmatpush1.msra.mxu0 %v478
    %537 = vmatprep.subr.mxu0 %v483
    %538 = vmatpush1.msra.mxu0 %v482
    %539 = vmatprep.subr.mxu0 %v487
    %540 = vmatpush1.msra.mxu0 %v486
    %541 = vmatprep.subr.mxu0 %v491
    %542 = vmatpush1.msra.mxu0 %v490
    %543 = vmatprep.subr.mxu0 %v495
    %544 = vmatpush1.msra.mxu0 %v494
    %545 = vmatprep.subr.mxu0 %v499
    %546 = vmatpush1.msra.mxu0 %v498
    %547 = vmatprep.subr.mxu0 %v503
    %548 = vmatpush1.msra.mxu0 %v502
    %549 = vmatprep.subr.mxu0 0.0
    %550 = vmatpush1.msra.mxu0 0.0
    %551 = vmatprep.subr.mxu0 0.0
    %552 = vmatpush1.msra.mxu0 0.0
    %553 = vmatprep.subr.mxu0 0.0
    %554 = vmatpush1.msra.mxu0 0.0
    %555 = vmatprep.subr.mxu0 0.0
    %556 = vmatpush1.msra.mxu0 0.0
    %557 = vmatprep.subr.mxu0 0.0
    %558 = vmatpush1.msra.mxu0 0.0
    %559 = vmatprep.subr.mxu0 0.0
    %560 = vmatpush1.msra.mxu0 0.0
    %561 = vmatprep.subr.mxu0 0.0
    %562 = vmatpush1.msra.mxu0 0.0
    %563 = vmatprep.subr.mxu0 0.0
    %564 = vmatpush1.msra.mxu0 0.0
    %565 = vmatprep.subr.mxu0 0.0
    %566 = vmatpush1.msra.mxu0 0.0
    %567 = vmatprep.subr.mxu0 0.0
    %568 = vmatpush1.msra.mxu0 0.0
    %569 = vmatprep.subr.mxu0 0.0
    %570 = vmatpush1.msra.mxu0 0.0
    %571 = vmatprep.subr.mxu0 0.0
    %572 = vmatpush1.msra.mxu0 0.0
    %573 = vmatprep.subr.mxu0 0.0
    %574 = vmatpush1.msra.mxu0 0.0
    %575 = vmatprep.subr.mxu0 0.0
    %576 = vmatpush1.msra.mxu0 0.0
    %577 = vmatprep.subr.mxu0 0.0
    %578 = vmatpush1.msra.mxu0 0.0
    %579 = vmatprep.subr.mxu0 0.0
    %580 = vmatpush1.msra.mxu0 0.0
    %581 = vmatprep.subr.mxu0 0.0
    %582 = vmatpush1.msra.mxu0 0.0
    %583 = vmatprep.subr.mxu0 0.0
    %584 = vmatpush1.msra.mxu0 0.0
    %585 = vmatprep.subr.mxu0 0.0
    %586 = vmatpush1.msra.mxu0 0.0
    %587 = vmatprep.subr.mxu0 0.0
    %588 = vmatpush1.msra.mxu0 0.0
    %589 = vmatprep.subr.mxu0 0.0
    %590 = vmatpush1.msra.mxu0 0.0
    %591 = vmatprep.subr.mxu0 0.0
    %592 = vmatpush1.msra.mxu0 0.0
    %593 = vmatprep.subr.mxu0 0.0
    %594 = vmatpush1.msra.mxu0 0.0
    %595 = vmatprep.mubr.f32.mxu0 0.0
    %596 = vmatmul.mubr.f32.gmra.mrb[0].mxu0 %v508
    %v597 = vpop.f32.mrb[0].mxu0
    %v598 = vadd.f32 0.0, %v597
    %v599 = vpop.f32.mrb[0].mxu0
    %v600 = vadd.f32 0.0, %v599
    %601 = vmatprep.mubr.f32.mxu0 0.0
    %602 = vmatmul.mubr.f32.gmra.mrb[0].mxu0 %v511
    %v603 = vpop.f32.mrb[0].mxu0
    %v604 = vadd.f32 0.0, %v603
    %v605 = vpop.f32.mrb[0].mxu0
    %v606 = vadd.f32 0.0, %v605
    %607 = vmatprep.mubr.f32.mxu0 0.0
    %608 = vmatmul.mubr.f32.gmra.mrb[0].mxu0 %v514
    %v609 = vpop.f32.mrb[0].mxu0
    %v610 = vadd.f32 0.0, %v609
    %v611 = vpop.f32.mrb[0].mxu0
    %v612 = vadd.f32 0.0, %v611
    %613 = vmatprep.mubr.f32.mxu0 0.0
    %614 = vmatmul.mubr.f32.gmra.mrb[0].mxu0 %v517
    %v615 = vpop.f32.mrb[0].mxu0
    %v616 = vadd.f32 0.0, %v615
    %v617 = vpop.f32.mrb[0].mxu0
    %v618 = vadd.f32 0.0, %v617
    %619 = vmatprep.mubr.f32.mxu0 0.0
    %620 = vmatmul.mubr.f32.gmra.mrb[0].mxu0 %v520
    %v621 = vpop.f32.mrb[0].mxu0
    %v622 = vadd.f32 0.0, %v621
    %v623 = vpop.f32.mrb[0].mxu0
    %v624 = vadd.f32 0.0, %v623
    %625 = vmatprep.mubr.f32.mxu0 0.0
    %626 = vmatmul.mubr.f32.gmra.mrb[0].mxu0 %v523
    %v627 = vpop.f32.mrb[0].mxu0
    %v628 = vadd.f32 0.0, %v627
    %v629 = vpop.f32.mrb[0].mxu0
    %v630 = vadd.f32 0.0, %v629
    %631 = vmatprep.mubr.f32.mxu0 0.0
    %632 = vmatmul.mubr.f32.gmra.mrb[0].mxu0 %v526
    %v633 = vpop.f32.mrb[0].mxu0
    %v634 = vadd.f32 0.0, %v633
    %v635 = vpop.f32.mrb[0].mxu0
    %v636 = vadd.f32 0.0, %v635
    %637 = vmatprep.mubr.f32.mxu0 0.0
    %638 = vmatmul.mubr.f32.gmra.mrb[0].mxu0 %v529
    %v639 = vpop.f32.mrb[0].mxu0
    %v640 = vadd.f32 0.0, %v639
    %v641 = vpop.f32.mrb[0].mxu0
    %v642 = vadd.f32 0.0, %v641
    %643 = vdwg.mxu0
    %644 = vmatprep.subr.mxu0 %v473
    %645 = vmatpush1.msra.mxu0 %v472
    %646 = vmatprep.subr.mxu0 %v477
    %647 = vmatpush1.msra.mxu0 %v476
    %648 = vmatprep.subr.mxu0 %v481
    %649 = vmatpush1.msra.mxu0 %v480
    %650 = vmatprep.subr.mxu0 %v485
    %651 = vmatpush1.msra.mxu0 %v484
    %652 = vmatprep.subr.mxu0 %v489
    %653 = vmatpush1.msra.mxu0 %v488
    %654 = vmatprep.subr.mxu0 %v493
    %655 = vmatpush1.msra.mxu0 %v492
    %656 = vmatprep.subr.mxu0 %v497
    %657 = vmatpush1.msra.mxu0 %v496
    %658 = vmatprep.subr.mxu0 %v501
    %659 = vmatpush1.msra.mxu0 %v500
    %660 = vmatprep.subr.mxu0 %v505
    %661 = vmatpush1.msra.mxu0 %v504
    %662 = vmatprep.subr.mxu0 0.0
    %663 = vmatpush1.msra.mxu0 0.0
    %664 = vmatprep.subr.mxu0 0.0
    %665 = vmatpush1.msra.mxu0 0.0
    %666 = vmatprep.subr.mxu0 0.0
    %667 = vmatpush1.msra.mxu0 0.0
    %668 = vmatprep.subr.mxu0 0.0
    %669 = vmatpush1.msra.mxu0 0.0
    %670 = vmatprep.subr.mxu0 0.0
    %671 = vmatpush1.msra.mxu0 0.0
    %672 = vmatprep.subr.mxu0 0.0
    %673 = vmatpush1.msra.mxu0 0.0
    %674 = vmatprep.subr.mxu0 0.0
    %675 = vmatpush1.msra.mxu0 0.0
    %676 = vmatprep.subr.mxu0 0.0
    %677 = vmatpush1.msra.mxu0 0.0
    %678 = vmatprep.subr.mxu0 0.0
    %679 = vmatpush1.msra.mxu0 0.0
    %680 = vmatprep.subr.mxu0 0.0
    %681 = vmatpush1.msra.mxu0 0.0
    %682 = vmatprep.subr.mxu0 0.0
    %683 = vmatpush1.msra.mxu0 0.0
    %684 = vmatprep.subr.mxu0 0.0
    %685 = vmatpush1.msra.mxu0 0.0
    %686 = vmatprep.subr.mxu0 0.0
    %687 = vmatpush1.msra.mxu0 0.0
    %688 = vmatprep.subr.mxu0 0.0
    %689 = vmatpush1.msra.mxu0 0.0
    %690 = vmatprep.subr.mxu0 0.0
    %691 = vmatpush1.msra.mxu0 0.0
    %692 = vmatprep.subr.mxu0 0.0
    %693 = vmatpush1.msra.mxu0 0.0
    %694 = vmatprep.subr.mxu0 0.0
    %695 = vmatpush1.msra.mxu0 0.0
    %696 = vmatprep.subr.mxu0 0.0
    %697 = vmatpush1.msra.mxu0 0.0
    %698 = vmatprep.subr.mxu0 0.0
    %699 = vmatpush1.msra.mxu0 0.0
    %700 = vmatprep.subr.mxu0 0.0
    %701 = vmatpush1.msra.mxu0 0.0
    %702 = vmatprep.subr.mxu0 0.0
    %703 = vmatpush1.msra.mxu0 0.0
    %704 = vmatprep.subr.mxu0 0.0
    %705 = vmatpush1.msra.mxu0 0.0
    %706 = vmatprep.subr.mxu0 0.0
    %707 = vmatpush1.msra.mxu0 0.0
    %708 = vmatprep.mubr.f32.mxu0 0.0
    %709 = vmatmul.mubr.f32.gmra.mrb[0].mxu0 %v508
    %v710 = vpop.f32.mrb[0].mxu0
    %v711 = vadd.f32 0.0, %v710
    %v712 = vpop.f32.mrb[0].mxu0
    %v713 = vadd.f32 0.0, %v712
    %714 = vmatprep.mubr.f32.mxu0 0.0
    %715 = vmatmul.mubr.f32.gmra.mrb[0].mxu0 %v511
    %v716 = vpop.f32.mrb[0].mxu0
    %v717 = vadd.f32 0.0, %v716
    %v718 = vpop.f32.mrb[0].mxu0
    %v719 = vadd.f32 0.0, %v718
    %720 = vmatprep.mubr.f32.mxu0 0.0
    %721 = vmatmul.mubr.f32.gmra.mrb[0].mxu0 %v514
    %v722 = vpop.f32.mrb[0].mxu0
    %v723 = vadd.f32 0.0, %v722
    %v724 = vpop.f32.mrb[0].mxu0
    %v725 = vadd.f32 0.0, %v724
    %726 = vmatprep.mubr.f32.mxu0 0.0
    %727 = vmatmul.mubr.f32.gmra.mrb[0].mxu0 %v517
    %v728 = vpop.f32.mrb[0].mxu0
    %v729 = vadd.f32 0.0, %v728
    %v730 = vpop.f32.mrb[0].mxu0
    %v731 = vadd.f32 0.0, %v730
    %732 = vmatprep.mubr.f32.mxu0 0.0
    %733 = vmatmul.mubr.f32.gmra.mrb[0].mxu0 %v520
    %v734 = vpop.f32.mrb[0].mxu0
    %v735 = vadd.f32 0.0, %v734
    %v736 = vpop.f32.mrb[0].mxu0
    %v737 = vadd.f32 0.0, %v736
    %738 = vmatprep.mubr.f32.mxu0 0.0
    %739 = vmatmul.mubr.f32.gmra.mrb[0].mxu0 %v523
    %v740 = vpop.f32.mrb[0].mxu0
    %v741 = vadd.f32 0.0, %v740
    %v742 = vpop.f32.mrb[0].mxu0
    %v743 = vadd.f32 0.0, %v742
    %744 = vmatprep.mubr.f32.mxu0 0.0
    %745 = vmatmul.mubr.f32.gmra.mrb[0].mxu0 %v526
    %v746 = vpop.f32.mrb[0].mxu0
    %v747 = vadd.f32 0.0, %v746
    %v748 = vpop.f32.mrb[0].mxu0
    %v749 = vadd.f32 0.0, %v748
    %750 = vmatprep.mubr.f32.mxu0 0.0
    %751 = vmatmul.mubr.f32.gmra.mrb[0].mxu0 %v529
    %v752 = vpop.f32.mrb[0].mxu0
    %v753 = vadd.f32 0.0, %v752
    %v754 = vpop.f32.mrb[0].mxu0
    %v755 = vadd.f32 0.0, %v754
    %756 = vdwg.mxu0
    %v757 = vadd.f32 %v598, %v600
    %758 = vadd.xlane.f32.xlu0 %v757
    %v759 = vpop.xlane.xlu0 %758
    %v760 = vadd.f32 %v604, %v606
    %761 = vadd.xlane.f32.xlu0 %v760
    %v762 = vpop.xlane.xlu0 %761
    %v763 = vadd.f32 %v610, %v612
    %764 = vadd.xlane.f32.xlu0 %v763
    %v765 = vpop.xlane.xlu0 %764
    %v766 = vadd.f32 %v616, %v618
    %767 = vadd.xlane.f32.xlu0 %v766
    %v768 = vpop.xlane.xlu0 %767
    %v769 = vadd.f32 %v622, %v624
    %770 = vadd.xlane.f32.xlu0 %v769
    %v771 = vpop.xlane.xlu0 %770
    %v772 = vadd.f32 %v628, %v630
    %773 = vadd.xlane.f32.xlu0 %v772
    %v774 = vpop.xlane.xlu0 %773
    %v775 = vadd.f32 %v634, %v636
    %776 = vadd.xlane.f32.xlu0 %v775
    %v777 = vpop.xlane.xlu0 %776
    %v778 = vadd.f32 %v640, %v642
    %779 = vadd.xlane.f32.xlu0 %v778
    %v780 = vpop.xlane.xlu0 %779
    %v781 = vmul.f32 %v759, 0.00390625
    %v782 = vmul.f32 %v762, 0.00390625
    %v783 = vmul.f32 %v765, 0.00390625
    %v784 = vmul.f32 %v768, 0.00390625
    %v785 = vmul.f32 %v771, 0.00390625
    %v786 = vmul.f32 %v774, 0.00390625
    %v787 = vmul.f32 %v777, 0.00390625
    %v788 = vmul.f32 %v780, 0.00390625
    %v789 = vmul.f32 %v598, %v598
    %v790 = vmul.f32 %v600, %v600
    %v791 = vmul.f32 %v604, %v604
    %v792 = vmul.f32 %v606, %v606
    %v793 = vmul.f32 %v610, %v610
    %v794 = vmul.f32 %v612, %v612
    %v795 = vmul.f32 %v616, %v616
    %v796 = vmul.f32 %v618, %v618
    %v797 = vmul.f32 %v622, %v622
    %v798 = vmul.f32 %v624, %v624
    %v799 = vmul.f32 %v628, %v628
    %v800 = vmul.f32 %v630, %v630
    %v801 = vmul.f32 %v634, %v634
    %v802 = vmul.f32 %v636, %v636
    %v803 = vmul.f32 %v640, %v640
    %v804 = vmul.f32 %v642, %v642
    %v805 = vadd.f32 %v789, %v790
    %806 = vadd.xlane.f32.xlu0 %v805
    %v807 = vpop.xlane.xlu0 %806
    %v808 = vadd.f32 %v791, %v792
    %809 = vadd.xlane.f32.xlu0 %v808
    %v810 = vpop.xlane.xlu0 %809
    %v811 = vadd.f32 %v793, %v794
    %812 = vadd.xlane.f32.xlu0 %v811
    %v813 = vpop.xlane.xlu0 %812
    %v814 = vadd.f32 %v795, %v796
    %815 = vadd.xlane.f32.xlu0 %v814
    %v816 = vpop.xlane.xlu0 %815
    %v817 = vadd.f32 %v797, %v798
    %818 = vadd.xlane.f32.xlu0 %v817
    %v819 = vpop.xlane.xlu0 %818
    %v820 = vadd.f32 %v799, %v800
    %821 = vadd.xlane.f32.xlu0 %v820
    %v822 = vpop.xlane.xlu0 %821
    %v823 = vadd.f32 %v801, %v802
    %824 = vadd.xlane.f32.xlu0 %v823
    %v825 = vpop.xlane.xlu0 %824
    %v826 = vadd.f32 %v803, %v804
    %827 = vadd.xlane.f32.xlu0 %v826
    %v828 = vpop.xlane.xlu0 %827
    %v829 = vmul.f32 %v807, 0.00390625
    %v830 = vmul.f32 %v810, 0.00390625
    %v831 = vmul.f32 %v813, 0.00390625
    %v832 = vmul.f32 %v816, 0.00390625
    %v833 = vmul.f32 %v819, 0.00390625
    %v834 = vmul.f32 %v822, 0.00390625
    %v835 = vmul.f32 %v825, 0.00390625
    %v836 = vmul.f32 %v828, 0.00390625
    %v837 = vmul.f32 %v781, %v781
    %v838 = vmul.f32 %v782, %v782
    %v839 = vmul.f32 %v783, %v783
    %v840 = vmul.f32 %v784, %v784
    %v841 = vmul.f32 %v785, %v785
    %v842 = vmul.f32 %v786, %v786
    %v843 = vmul.f32 %v787, %v787
    %v844 = vmul.f32 %v788, %v788
    %v845 = vsub.f32 %v829, %v837
    %v846 = vsub.f32 %v830, %v838
    %v847 = vsub.f32 %v831, %v839
    %v848 = vsub.f32 %v832, %v840
    %v849 = vsub.f32 %v833, %v841
    %v850 = vsub.f32 %v834, %v842
    %v851 = vsub.f32 %v835, %v843
    %v852 = vsub.f32 %v836, %v844
    %v853 = vsub.f32 %v598, %v781
    %v854 = vsub.f32 %v600, %v781
    %v855 = vsub.f32 %v604, %v782
    %v856 = vsub.f32 %v606, %v782
    %v857 = vsub.f32 %v610, %v783
    %v858 = vsub.f32 %v612, %v783
    %v859 = vsub.f32 %v616, %v784
    %v860 = vsub.f32 %v618, %v784
    %v861 = vsub.f32 %v622, %v785
    %v862 = vsub.f32 %v624, %v785
    %v863 = vsub.f32 %v628, %v786
    %v864 = vsub.f32 %v630, %v786
    %v865 = vsub.f32 %v634, %v787
    %v866 = vsub.f32 %v636, %v787
    %v867 = vsub.f32 %v640, %v788
    %v868 = vsub.f32 %v642, %v788
    %v869 = vadd.f32 %v845, 1e-05
    %v870 = vadd.f32 %v846, 1e-05
    %v871 = vadd.f32 %v847, 1e-05
    %v872 = vadd.f32 %v848, 1e-05
    %v873 = vadd.f32 %v849, 1e-05
    %v874 = vadd.f32 %v850, 1e-05
    %v875 = vadd.f32 %v851, 1e-05
    %v876 = vadd.f32 %v852, 1e-05
    %v877 = vrsqrt.pop %v869
    %v878 = vrsqrt.pop %v870
    %v879 = vrsqrt.pop %v871
    %v880 = vrsqrt.pop %v872
    %v881 = vrsqrt.pop %v873
    %v882 = vrsqrt.pop %v874
    %v883 = vrsqrt.pop %v875
    %v884 = vrsqrt.pop %v876
    %v885 = vmul.f32 %v853, %v877
    %v886 = vmul.f32 %v854, %v877
    %v887 = vmul.f32 %v855, %v878
    %v888 = vmul.f32 %v856, %v878
    %v889 = vmul.f32 %v857, %v879
    %v890 = vmul.f32 %v858, %v879
    %v891 = vmul.f32 %v859, %v880
    %v892 = vmul.f32 %v860, %v880
    %v893 = vmul.f32 %v861, %v881
    %v894 = vmul.f32 %v862, %v881
    %v895 = vmul.f32 %v863, %v882
    %v896 = vmul.f32 %v864, %v882
    %v897 = vmul.f32 %v865, %v883
    %v898 = vmul.f32 %v866, %v883
    %v899 = vmul.f32 %v867, %v884
    %v900 = vmul.f32 %v868, %v884
    %v901 = vmax.f32 %v885, 0.0
    %v902 = vmax.f32 %v886, 0.0
    %v903 = vmax.f32 %v887, 0.0
    %v904 = vmax.f32 %v888, 0.0
    %v905 = vmax.f32 %v889, 0.0
    %v906 = vmax.f32 %v890, 0.0
    %v907 = vmax.f32 %v891, 0.0
    %v908 = vmax.f32 %v892, 0.0
    %v909 = vmax.f32 %v893, 0.0
    %v910 = vmax.f32 %v894, 0.0
    %v911 = vmax.f32 %v895, 0.0
    %v912 = vmax.f32 %v896, 0.0
    %v913 = vmax.f32 %v897, 0.0
    %v914 = vmax.f32 %v898, 0.0
    %v915 = vmax.f32 %v899, 0.0
    %v916 = vmax.f32 %v900, 0.0
    %v917 = vadd.f32 %v711, %v713
    %918 = vadd.xlane.f32.xlu0 %v917
    %v919 = vpop.xlane.xlu0 %918
    %v920 = vadd.f32 %v717, %v719
    %921 = vadd.xlane.f32.xlu0 %v920
    %v922 = vpop.xlane.xlu0 %921
    %v923 = vadd.f32 %v723, %v725
    %924 = vadd.xlane.f32.xlu0 %v923
    %v925 = vpop.xlane.xlu0 %924
    %v926 = vadd.f32 %v729, %v731
    %927 = vadd.xlane.f32.xlu0 %v926
    %v928 = vpop.xlane.xlu0 %927
    %v929 = vadd.f32 %v735, %v737
    %930 = vadd.xlane.f32.xlu0 %v929
    %v931 = vpop.xlane.xlu0 %930
    %v932 = vadd.f32 %v741, %v743
    %933 = vadd.xlane.f32.xlu0 %v932
    %v934 = vpop.xlane.xlu0 %933
    %v935 = vadd.f32 %v747, %v749
    %936 = vadd.xlane.f32.xlu0 %v935
    %v937 = vpop.xlane.xlu0 %936
    %v938 = vadd.f32 %v753, %v755
    %939 = vadd.xlane.f32.xlu0 %v938
    %v940 = vpop.xlane.xlu0 %939
    %v941 = vmul.f32 %v919, 0.00390625
    %v942 = vmul.f32 %v922, 0.00390625
    %v943 = vmul.f32 %v925, 0.00390625
    %v944 = vmul.f32 %v928, 0.00390625
    %v945 = vmul.f32 %v931, 0.00390625
    %v946 = vmul.f32 %v934, 0.00390625
    %v947 = vmul.f32 %v937, 0.00390625
    %v948 = vmul.f32 %v940, 0.00390625
    %v949 = vmul.f32 %v711, %v711
    %v950 = vmul.f32 %v713, %v713
    %v951 = vmul.f32 %v717, %v717
    %v952 = vmul.f32 %v719, %v719
    %v953 = vmul.f32 %v723, %v723
    %v954 = vmul.f32 %v725, %v725
    %v955 = vmul.f32 %v729, %v729
    %v956 = vmul.f32 %v731, %v731
    %v957 = vmul.f32 %v735, %v735
    %v958 = vmul.f32 %v737, %v737
    %v959 = vmul.f32 %v741, %v741
    %v960 = vmul.f32 %v743, %v743
    %v961 = vmul.f32 %v747, %v747
    %v962 = vmul.f32 %v749, %v749
    %v963 = vmul.f32 %v753, %v753
    %v964 = vmul.f32 %v755, %v755
    %v965 = vadd.f32 %v949, %v950
    %966 = vadd.xlane.f32.xlu0 %v965
    %v967 = vpop.xlane.xlu0 %966
    %v968 = vadd.f32 %v951, %v952
    %969 = vadd.xlane.f32.xlu0 %v968
    %v970 = vpop.xlane.xlu0 %969
    %v971 = vadd.f32 %v953, %v954
    %972 = vadd.xlane.f32.xlu0 %v971
    %v973 = vpop.xlane.xlu0 %972
    %v974 = vadd.f32 %v955, %v956
    %975 = vadd.xlane.f32.xlu0 %v974
    %v976 = vpop.xlane.xlu0 %975
    %v977 = vadd.f32 %v957, %v958
    %978 = vadd.xlane.f32.xlu0 %v977
    %v979 = vpop.xlane.xlu0 %978
    %v980 = vadd.f32 %v959, %v960
    %981 = vadd.xlane.f32.xlu0 %v980
    %v982 = vpop.xlane.xlu0 %981
    %v983 = vadd.f32 %v961, %v962
    %984 = vadd.xlane.f32.xlu0 %v983
    %v985 = vpop.xlane.xlu0 %984
    %v986 = vadd.f32 %v963, %v964
    %987 = vadd.xlane.f32.xlu0 %v986
    %v988 = vpop.xlane.xlu0 %987
    %v989 = vmul.f32 %v967, 0.00390625
    %v990 = vmul.f32 %v970, 0.00390625
    %v991 = vmul.f32 %v973, 0.00390625
    %v992 = vmul.f32 %v976, 0.00390625
    %v993 = vmul.f32 %v979, 0.00390625
    %v994 = vmul.f32 %v982, 0.00390625
    %v995 = vmul.f32 %v985, 0.00390625
    %v996 = vmul.f32 %v988, 0.00390625
    %v997 = vmul.f32 %v941, %v941
    %v998 = vmul.f32 %v942, %v942
    %v999 = vmul.f32 %v943, %v943
    %v1000 = vmul.f32 %v944, %v944
    %v1001 = vmul.f32 %v945, %v945
    %v1002 = vmul.f32 %v946, %v946
    %v1003 = vmul.f32 %v947, %v947
    %v1004 = vmul.f32 %v948, %v948
    %v1005 = vsub.f32 %v989, %v997
    %v1006 = vsub.f32 %v990, %v998
    %v1007 = vsub.f32 %v991, %v999
    %v1008 = vsub.f32 %v992, %v1000
    %v1009 = vsub.f32 %v993, %v1001
    %v1010 = vsub.f32 %v994, %v1002
    %v1011 = vsub.f32 %v995, %v1003
    %v1012 = vsub.f32 %v996, %v1004
    %v1013 = vsub.f32 %v711, %v941
    %v1014 = vsub.f32 %v713, %v941
    %v1015 = vsub.f32 %v717, %v942
    %v1016 = vsub.f32 %v719, %v942
    %v1017 = vsub.f32 %v723, %v943
    %v1018 = vsub.f32 %v725, %v943
    %v1019 = vsub.f32 %v729, %v944
    %v1020 = vsub.f32 %v731, %v944
    %v1021 = vsub.f32 %v735, %v945
    %v1022 = vsub.f32 %v737, %v945
    %v1023 = vsub.f32 %v741, %v946
    %v1024 = vsub.f32 %v743, %v946
    %v1025 = vsub.f32 %v747, %v947
    %v1026 = vsub.f32 %v749, %v947
    %v1027 = vsub.f32 %v753, %v948
    %v1028 = vsub.f32 %v755, %v948
    %v1029 = vadd.f32 %v1005, 1e-05
    %v1030 = vadd.f32 %v1006, 1e-05
    %v1031 = vadd.f32 %v1007, 1e-05
    %v1032 = vadd.f32 %v1008, 1e-05
    %v1033 = vadd.f32 %v1009, 1e-05
    %v1034 = vadd.f32 %v1010, 1e-05
    %v1035 = vadd.f32 %v1011, 1e-05
    %v1036 = vadd.f32 %v1012, 1e-05
    %v1037 = vrsqrt.pop %v1029
    %v1038 = vrsqrt.pop %v1030
    %v1039 = vrsqrt.pop %v1031
    %v1040 = vrsqrt.pop %v1032
    %v1041 = vrsqrt.pop %v1033
    %v1042 = vrsqrt.pop %v1034
    %v1043 = vrsqrt.pop %v1035
    %v1044 = vrsqrt.pop %v1036
    %v1045 = vmul.f32 %v1013, %v1037
    %v1046 = vmul.f32 %v1014, %v1037
    %v1047 = vmul.f32 %v1015, %v1038
    %v1048 = vmul.f32 %v1016, %v1038
    %v1049 = vmul.f32 %v1017, %v1039
    %v1050 = vmul.f32 %v1018, %v1039
    %v1051 = vmul.f32 %v1019, %v1040
    %v1052 = vmul.f32 %v1020, %v1040
    %v1053 = vmul.f32 %v1021, %v1041
    %v1054 = vmul.f32 %v1022, %v1041
    %v1055 = vmul.f32 %v1023, %v1042
    %v1056 = vmul.f32 %v1024, %v1042
    %v1057 = vmul.f32 %v1025, %v1043
    %v1058 = vmul.f32 %v1026, %v1043
    %v1059 = vmul.f32 %v1027, %v1044
    %v1060 = vmul.f32 %v1028, %v1044
    %v1061 = vmax.f32 %v1045, 0.0
    %v1062 = vmax.f32 %v1046, 0.0
    %v1063 = vmax.f32 %v1047, 0.0
    %v1064 = vmax.f32 %v1048, 0.0
    %v1065 = vmax.f32 %v1049, 0.0
    %v1066 = vmax.f32 %v1050, 0.0
    %v1067 = vmax.f32 %v1051, 0.0
    %v1068 = vmax.f32 %v1052, 0.0
    %v1069 = vmax.f32 %v1053, 0.0
    %v1070 = vmax.f32 %v1054, 0.0
    %v1071 = vmax.f32 %v1055, 0.0
    %v1072 = vmax.f32 %v1056, 0.0
    %v1073 = vmax.f32 %v1057, 0.0
    %v1074 = vmax.f32 %v1058, 0.0
    %v1075 = vmax.f32 %v1059, 0.0
    %v1076 = vmax.f32 %v1060, 0.0
    %v1077 = vsub.f32 %v901, %v1061
    %v1078 = vsub.f32 %v902, %v1062
    %v1079 = vsub.f32 %v903, %v1063
    %v1080 = vsub.f32 %v904, %v1064
    %v1081 = vsub.f32 %v905, %v1065
    %v1082 = vsub.f32 %v906, %v1066
    %v1083 = vsub.f32 %v907, %v1067
    %v1084 = vsub.f32 %v908, %v1068
    %v1085 = vsub.f32 %v909, %v1069
    %v1086 = vsub.f32 %v910, %v1070
    %v1087 = vsub.f32 %v911, %v1071
    %v1088 = vsub.f32 %v912, %v1072
    %v1089 = vsub.f32 %v913, %v1073
    %v1090 = vsub.f32 %v914, %v1074
    %v1091 = vsub.f32 %v915, %v1075
    %v1092 = vsub.f32 %v916, %v1076
    %v1093 = vmul.f32 %v1077, %v1077
    %v1094 = vmul.f32 %v1078, %v1078
    %v1095 = vmul.f32 %v1079, %v1079
    %v1096 = vmul.f32 %v1080, %v1080
    %v1097 = vmul.f32 %v1081, %v1081
    %v1098 = vmul.f32 %v1082, %v1082
    %v1099 = vmul.f32 %v1083, %v1083
    %v1100 = vmul.f32 %v1084, %v1084
    %v1101 = vmul.f32 %v1085, %v1085
    %v1102 = vmul.f32 %v1086, %v1086
    %v1103 = vmul.f32 %v1087, %v1087
    %v1104 = vmul.f32 %v1088, %v1088
    %v1105 = vmul.f32 %v1089, %v1089
    %v1106 = vmul.f32 %v1090, %v1090
    %v1107 = vmul.f32 %v1091, %v1091
    %v1108 = vmul.f32 %v1092, %v1092
    %vm1109 = vcmask 523264
    %v1111 = vsel %vm1109, 0.125, 0
    %1113 = vmatprep.subr.mxu0 %v1094
    %1114 = vmatpush1.msra.mxu0 %v1093
    %1115 = vmatprep.subr.mxu0 %v1096
    %1116 = vmatpush1.msra.mxu0 %v1095
    %1117 = vmatprep.subr.mxu0 %v1098
    %1118 = vmatpush1.msra.mxu0 %v1097
    %1119 = vmatprep.subr.mxu0 %v1100
    %1120 = vmatpush1.msra.mxu0 %v1099
    %1121 = vmatprep.subr.mxu0 %v1102
    %1122 = vmatpush1.msra.mxu0 %v1101
    %1123 = vmatprep.subr.mxu0 %v1104
    %1124 = vmatpush1.msra.mxu0 %v1103
    %1125 = vmatprep.subr.mxu0 %v1106
    %1126 = vmatpush1.msra.mxu0 %v1105
    %1127 = vmatprep.subr.mxu0 %v1108
    %1128 = vmatpush1.msra.mxu0 %v1107
    %1129 = vmatprep.subr.mxu0 0.0
    %1130 = vmatpush1.msra.mxu0 0.0
    %1131 = vmatprep.subr.mxu0 0.0
    %1132 = vmatpush1.msra.mxu0 0.0
    %1133 = vmatprep.subr.mxu0 0.0
    %1134 = vmatpush1.msra.mxu0 0.0
    %1135 = vmatprep.subr.mxu0 0.0
    %1136 = vmatpush1.msra.mxu0 0.0
    %1137 = vmatprep.subr.mxu0 0.0
    %1138 = vmatpush1.msra.mxu0 0.0
    %1139 = vmatprep.subr.mxu0 0.0
    %1140 = vmatpush1.msra.mxu0 0.0
    %1141 = vmatprep.subr.mxu0 0.0
    %1142 = vmatpush1.msra.mxu0 0.0
    %1143 = vmatprep.subr.mxu0 0.0
    %1144 = vmatpush1.msra.mxu0 0.0
    %1145 = vmatprep.subr.mxu0 0.0
    %1146 = vmatpush1.msra.mxu0 0.0
    %1147 = vmatprep.subr.mxu0 0.0
    %1148 = vmatpush1.msra.mxu0 0.0
    %1149 = vmatprep.subr.mxu0 0.0
    %1150 = vmatpush1.msra.mxu0 0.0
    %1151 = vmatprep.subr.mxu0 0.0
    %1152 = vmatpush1.msra.mxu0 0.0
    %1153 = vmatprep.subr.mxu0 0.0
    %1154 = vmatpush1.msra.mxu0 0.0
    %1155 = vmatprep.subr.mxu0 0.0
    %1156 = vmatpush1.msra.mxu0 0.0
    %1157 = vmatprep.subr.mxu0 0.0
    %1158 = vmatpush1.msra.mxu0 0.0
    %1159 = vmatprep.subr.mxu0 0.0
    %1160 = vmatpush1.msra.mxu0 0.0
    %1161 = vmatprep.subr.mxu0 0.0
    %1162 = vmatpush1.msra.mxu0 0.0
    %1163 = vmatprep.subr.mxu0 0.0
    %1164 = vmatpush1.msra.mxu0 0.0
    %1165 = vmatprep.subr.mxu0 0.0
    %1166 = vmatpush1.msra.mxu0 0.0
    %1167 = vmatprep.subr.mxu0 0.0
    %1168 = vmatpush1.msra.mxu0 0.0
    %1169 = vmatprep.subr.mxu0 0.0
    %1170 = vmatpush1.msra.mxu0 0.0
    %1171 = vmatprep.subr.mxu0 0.0
    %1172 = vmatpush1.msra.mxu0 0.0
    %1173 = vmatprep.subr.mxu0 0.0
    %1174 = vmatpush1.msra.mxu0 0.0
    %1175 = vmatprep.subr.mxu0 0.0
    %1176 = vmatpush1.msra.mxu0 0.0
    %1177 = vmatprep.mubr.f32.mxu0 0.0
    %1178 = vmatmul.mubr.f32.gmra.mrb[0].mxu0 %v1111
    %v1179 = vpop.f32.mrb[0].mxu0
    %v1180 = vadd.f32 0.0, %v1179
    %v1181 = vpop.f32.mrb[0].mxu0
    %v1182 = vadd.f32 0.0, %v1181
    %1183 = vdwg.mxu0
    %v1184 = vadd.f32 %v1180, %v1182
    %v1185 = vadd.f32 %v1184, 0.0
    %s1186 = scalar_lea.vmem %s0, 8
    %v1187 = vld [vmem:[%s1186] sm:$0x77]
    %v1189 = vcombine.high %v1187, %v1187
    %1191 = vst [vmem:[#allocation2 + $0x8] sm:$0x7] %v1187
    %1192 = vst [vmem:[#allocation2 + $0x10] sm:$0x7] %v1189
    %s1193 = scalar_lea.vmem %s1, 8
    %v1194 = vld [vmem:[%s1193] sm:$0x77]
    %v1196 = vcombine.high %v1194, %v1194
    %1198 = vst [vmem:[%s53 + $0x8] sm:$0x7] %v1194
    %1199 = vst [vmem:[%s53 + $0x10] sm:$0x7] %v1196
    %v1200 = vld [vmem:[#allocation2] sm:$0xff]
    %v1201 = vld [vmem:[#allocation2 + $0x8] sm:$0xff]
    %v1202 = vld [vmem:[#allocation2 + $0x10] sm:$0xff]
    %v1203 = vld [vmem:[%s53] sm:$0xff]
    %v1204 = vld [vmem:[%s53 + $0x8] sm:$0xff]
    %v1205 = vld [vmem:[%s53 + $0x10] sm:$0xff]
    %v1206 = vmul.f32 %v1200, %v72
    %v1207 = vmul.f32 %v1201, %v76
    %v1208 = vmul.f32 %v1202, %v74
    %v1209 = vmul.f32 %v1203, %v72
    %v1210 = vmul.f32 %v1204, %v76
    %v1211 = vmul.f32 %v1205, %v74
    %1215 = vrot.lane.b32.xlu0 %v1206, 17
    %v1216 = vpop.permute.xlu0 %1215
    %1217 = vrot.lane.b32.xlu0 %v1207, 17
    %v1218 = vpop.permute.xlu0 %1217
    %1219 = vrot.lane.b32.xlu0 %v1208, 17
    %v1220 = vpop.permute.xlu0 %1219
    %v1221 = vsel %vm95, %v1216, %v1218
    %v1222 = vsel %vm95, %v1218, %v1220
    %1225 = vst [vmem:[#allocation3] sm:$0xff] %v1221
    %1226 = vst [vmem:[#allocation3 + $0x8] sm:$0xff] %v1222
    %1230 = vrot.lane.b32.xlu0 %v1209, 17
    %v1231 = vpop.permute.xlu0 %1230
    %1232 = vrot.lane.b32.xlu0 %v1210, 17
    %v1233 = vpop.permute.xlu0 %1232
    %1234 = vrot.lane.b32.xlu0 %v1211, 17
    %v1235 = vpop.permute.xlu0 %1234
    %v1236 = vsel %vm95, %v1231, %v1233
    %v1237 = vsel %vm95, %v1233, %v1235
    %1240 = vst [vmem:[#allocation3 + $0x10] sm:$0xff] %v1236
    %1241 = vst [vmem:[#allocation3 + $0x18] sm:$0xff] %v1237
    %v1242 = vld [vmem:[#allocation2] sm:$0xff]
    %v1243 = vld [vmem:[#allocation2 + $0x8] sm:$0xff]
    %v1244 = vld [vmem:[#allocation2 + $0x10] sm:$0xff]
    %v1245 = vld [vmem:[%s53] sm:$0xff]
    %v1246 = vld [vmem:[%s53 + $0x8] sm:$0xff]
    %v1247 = vld [vmem:[%s53 + $0x10] sm:$0xff]
    %1251 = vrot.lane.b32.xlu0 %v1242, 16
    %v1252 = vpop.permute.xlu0 %1251
    %1253 = vrot.lane.b32.xlu0 %v1243, 16
    %v1254 = vpop.permute.xlu0 %1253
    %1255 = vrot.lane.b32.xlu0 %v1244, 16
    %v1256 = vpop.permute.xlu0 %1255
    %v1257 = vsel %vm132, %v1252, %v1254
    %v1258 = vsel %vm132, %v1254, %v1256
    %1261 = vst [vmem:[#allocation3 + $0x20] sm:$0xff] %v1257
    %1262 = vst [vmem:[#allocation3 + $0x28] sm:$0xff] %v1258
    %1266 = vrot.lane.b32.xlu0 %v1245, 16
    %v1267 = vpop.permute.xlu0 %1266
    %1268 = vrot.lane.b32.xlu0 %v1246, 16
    %v1269 = vpop.permute.xlu0 %1268
    %1270 = vrot.lane.b32.xlu0 %v1247, 16
    %v1271 = vpop.permute.xlu0 %1270
    %v1272 = vsel %vm132, %v1267, %v1269
    %v1273 = vsel %vm132, %v1269, %v1271
    %1276 = vst [vmem:[#allocation3 + $0x30] sm:$0xff] %v1272
    %1277 = vst [vmem:[#allocation3 + $0x38] sm:$0xff] %v1273
    %v1278 = vld [vmem:[#allocation2] sm:$0xff]
    %v1279 = vld [vmem:[#allocation2 + $0x8] sm:$0xff]
    %v1280 = vld [vmem:[#allocation2 + $0x10] sm:$0xff]
    %v1281 = vld [vmem:[%s53] sm:$0xff]
    %v1282 = vld [vmem:[%s53 + $0x8] sm:$0xff]
    %v1283 = vld [vmem:[%s53 + $0x10] sm:$0xff]
    %v1284 = vmul.f32 %v1278, %v170
    %v1285 = vmul.f32 %v1279, %v174
    %v1286 = vmul.f32 %v1280, %v172
    %v1287 = vmul.f32 %v1281, %v170
    %v1288 = vmul.f32 %v1282, %v174
    %v1289 = vmul.f32 %v1283, %v172
    %1293 = vrot.lane.b32.xlu0 %v1284, 15
    %v1294 = vpop.permute.xlu0 %1293
    %1295 = vrot.lane.b32.xlu0 %v1285, 15
    %v1296 = vpop.permute.xlu0 %1295
    %1297 = vrot.lane.b32.xlu0 %v1286, 15
    %v1298 = vpop.permute.xlu0 %1297
    %v1299 = vsel %vm193, %v1294, %v1296
    %v1300 = vsel %vm193, %v1296, %v1298
    %1303 = vst [vmem:[#allocation3 + $0x40] sm:$0xff] %v1299
    %1304 = vst [vmem:[#allocation3 + $0x48] sm:$0xff] %v1300
    %1308 = vrot.lane.b32.xlu0 %v1287, 15
    %v1309 = vpop.permute.xlu0 %1308
    %1310 = vrot.lane.b32.xlu0 %v1288, 15
    %v1311 = vpop.permute.xlu0 %1310
    %1312 = vrot.lane.b32.xlu0 %v1289, 15
    %v1313 = vpop.permute.xlu0 %1312
    %v1314 = vsel %vm193, %v1309, %v1311
    %v1315 = vsel %vm193, %v1311, %v1313
    %1318 = vst [vmem:[#allocation3 + $0x50] sm:$0xff] %v1314
    %1319 = vst [vmem:[#allocation3 + $0x58] sm:$0xff] %v1315
    %v1320 = vld [vmem:[#allocation2] sm:$0xff]
    %v1321 = vld [vmem:[#allocation2 + $0x8] sm:$0xff]
    %v1322 = vld [vmem:[#allocation2 + $0x10] sm:$0xff]
    %v1323 = vld [vmem:[%s53] sm:$0xff]
    %v1324 = vld [vmem:[%s53 + $0x8] sm:$0xff]
    %v1325 = vld [vmem:[%s53 + $0x10] sm:$0xff]
    %v1326 = vmul.f32 %v1320, %v222
    %v1327 = vmul.f32 %v1321, %v226
    %v1328 = vmul.f32 %v1322, %v224
    %v1329 = vmul.f32 %v1323, %v222
    %v1330 = vmul.f32 %v1324, %v226
    %v1331 = vmul.f32 %v1325, %v224
    %1335 = vrot.lane.b32.xlu0 %v1326, 1
    %v1336 = vpop.permute.xlu0 %1335
    %1337 = vrot.lane.b32.xlu0 %v1327, 1
    %v1338 = vpop.permute.xlu0 %1337
    %1339 = vrot.lane.b32.xlu0 %v1328, 1
    %v1340 = vpop.permute.xlu0 %1339
    %v1341 = vsel %vm245, %v1336, %v1338
    %v1342 = vsel %vm245, %v1338, %v1340
    %1345 = vst [vmem:[#allocation3 + $0x60] sm:$0xff] %v1341
    %1346 = vst [vmem:[#allocation3 + $0x68] sm:$0xff] %v1342
    %1350 = vrot.lane.b32.xlu0 %v1329, 1
    %v1351 = vpop.permute.xlu0 %1350
    %1352 = vrot.lane.b32.xlu0 %v1330, 1
    %v1353 = vpop.permute.xlu0 %1352
    %1354 = vrot.lane.b32.xlu0 %v1331, 1
    %v1355 = vpop.permute.xlu0 %1354
    %v1356 = vsel %vm245, %v1351, %v1353
    %v1357 = vsel %vm245, %v1353, %v1355
    %1360 = vst [vmem:[#allocation3 + $0x70] sm:$0xff] %v1356
    %1361 = vst [vmem:[#allocation3 + $0x78] sm:$0xff] %v1357
    %v1362 = vld [vmem:[#allocation2 + $0x8] sm:$0xff]
    %v1363 = vld [vmem:[#allocation2 + $0x10] sm:$0xff]
    %v1364 = vld [vmem:[%s53 + $0x8] sm:$0xff]
    %v1365 = vld [vmem:[%s53 + $0x10] sm:$0xff]
    %1366 = vst [vmem:[#allocation3 + $0x80] sm:$0xff] %v1362
    %1367 = vst [vmem:[#allocation3 + $0x88] sm:$0xff] %v1363
    %1368 = vst [vmem:[#allocation3 + $0x90] sm:$0xff] %v1364
    %1369 = vst [vmem:[#allocation3 + $0x98] sm:$0xff] %v1365
    %v1370 = vld [vmem:[#allocation2 + $0x8] sm:$0xff]
    %v1371 = vld [vmem:[#allocation2 + $0x10] sm:$0xff]
    %v1372 = vld [vmem:[#allocation2 + $0x18] sm:$0xff]
    %v1373 = vld [vmem:[%s53 + $0x8] sm:$0xff]
    %v1374 = vld [vmem:[%s53 + $0x10] sm:$0xff]
    %v1375 = vld [vmem:[%s53 + $0x18] sm:$0xff]
    %v1376 = vmul.f32 %v1370, %v282
    %v1377 = vmul.f32 %v1371, %v285
    %v1378 = vmul.f32 %v1372, %v284
    %v1379 = vmul.f32 %v1373, %v282
    %v1380 = vmul.f32 %v1374, %v285
    %v1381 = vmul.f32 %v1375, %v284
    %1385 = vrot.lane.b32.xlu0 %v1376, 127
    %v1386 = vpop.permute.xlu0 %1385
    %1387 = vrot.lane.b32.xlu0 %v1377, 127
    %v1388 = vpop.permute.xlu0 %1387
    %1389 = vrot.lane.b32.xlu0 %v1378, 127
    %v1390 = vpop.permute.xlu0 %1389
    %v1391 = vsel %vm225, %v1386, %v1388
    %v1392 = vsel %vm225, %v1388, %v1390
    %1395 = vst [vmem:[#allocation3 + $0xa0] sm:$0xff] %v1391
    %1396 = vst [vmem:[#allocation3 + $0xa8] sm:$0xff] %v1392
    %1400 = vrot.lane.b32.xlu0 %v1379, 127
    %v1401 = vpop.permute.xlu0 %1400
    %1402 = vrot.lane.b32.xlu0 %v1380, 127
    %v1403 = vpop.permute.xlu0 %1402
    %1404 = vrot.lane.b32.xlu0 %v1381, 127
    %v1405 = vpop.permute.xlu0 %1404
    %v1406 = vsel %vm225, %v1401, %v1403
    %v1407 = vsel %vm225, %v1403, %v1405
    %1410 = vst [vmem:[#allocation3 + $0xb0] sm:$0xff] %v1406
    %1411 = vst [vmem:[#allocation3 + $0xb8] sm:$0xff] %v1407
    %v1412 = vld [vmem:[#allocation2 + $0x8] sm:$0xff]
    %v1413 = vld [vmem:[#allocation2 + $0x10] sm:$0xff]
    %v1414 = vld [vmem:[#allocation2 + $0x18] sm:$0xff]
    %v1415 = vld [vmem:[%s53 + $0x8] sm:$0xff]
    %v1416 = vld [vmem:[%s53 + $0x10] sm:$0xff]
    %v1417 = vld [vmem:[%s53 + $0x18] sm:$0xff]
    %v1418 = vmul.f32 %v1412, %v332
    %v1419 = vmul.f32 %v1413, %v335
    %v1420 = vmul.f32 %v1414, %v334
    %v1421 = vmul.f32 %v1415, %v332
    %v1422 = vmul.f32 %v1416, %v335
    %v1423 = vmul.f32 %v1417, %v334
    %1427 = vrot.lane.b32.xlu0 %v1418, 113
    %v1428 = vpop.permute.xlu0 %1427
    %1429 = vrot.lane.b32.xlu0 %v1419, 113
    %v1430 = vpop.permute.xlu0 %1429
    %1431 = vrot.lane.b32.xlu0 %v1420, 113
    %v1432 = vpop.permute.xlu0 %1431
    %v1433 = vsel %vm173, %v1428, %v1430
    %v1434 = vsel %vm173, %v1430, %v1432
    %1437 = vst [vmem:[#allocation3 + $0xc0] sm:$0xff] %v1433
    %1438 = vst [vmem:[#allocation3 + $0xc8] sm:$0xff] %v1434
    %1442 = vrot.lane.b32.xlu0 %v1421, 113
    %v1443 = vpop.permute.xlu0 %1442
    %1444 = vrot.lane.b32.xlu0 %v1422, 113
    %v1445 = vpop.permute.xlu0 %1444
    %1446 = vrot.lane.b32.xlu0 %v1423, 113
    %v1447 = vpop.permute.xlu0 %1446
    %v1448 = vsel %vm173, %v1443, %v1445
    %v1449 = vsel %vm173, %v1445, %v1447
    %1452 = vst [vmem:[#allocation3 + $0xd0] sm:$0xff] %v1448
    %1453 = vst [vmem:[#allocation3 + $0xd8] sm:$0xff] %v1449
    %v1454 = vld [vmem:[#allocation2 + $0x8] sm:$0xff]
    %v1455 = vld [vmem:[#allocation2 + $0x10] sm:$0xff]
    %v1456 = vld [vmem:[#allocation2 + $0x18] sm:$0xff]
    %v1457 = vld [vmem:[%s53 + $0x8] sm:$0xff]
    %v1458 = vld [vmem:[%s53 + $0x10] sm:$0xff]
    %v1459 = vld [vmem:[%s53 + $0x18] sm:$0xff]
    %1463 = vrot.lane.b32.xlu0 %v1454, 112
    %v1464 = vpop.permute.xlu0 %1463
    %1465 = vrot.lane.b32.xlu0 %v1455, 112
    %v1466 = vpop.permute.xlu0 %1465
    %1467 = vrot.lane.b32.xlu0 %v1456, 112
    %v1468 = vpop.permute.xlu0 %1467
    %v1469 = vsel %vm390, %v1464, %v1466
    %v1470 = vsel %vm390, %v1466, %v1468
    %1473 = vst [vmem:[#allocation3 + $0xe0] sm:$0xff] %v1469
    %1474 = vst [vmem:[#allocation3 + $0xe8] sm:$0xff] %v1470
    %1478 = vrot.lane.b32.xlu0 %v1457, 112
    %v1479 = vpop.permute.xlu0 %1478
    %1480 = vrot.lane.b32.xlu0 %v1458, 112
    %v1481 = vpop.permute.xlu0 %1480
    %1482 = vrot.lane.b32.xlu0 %v1459, 112
    %v1483 = vpop.permute.xlu0 %1482
    %v1484 = vsel %vm390, %v1479, %v1481
    %v1485 = vsel %vm390, %v1481, %v1483
    %1488 = vst [vmem:[#allocation3 + $0xf0] sm:$0xff] %v1484
    %1489 = vst [vmem:[#allocation3 + $0xf8] sm:$0xff] %v1485
    %v1490 = vld [vmem:[#allocation2 + $0x8] sm:$0xff]
    %v1491 = vld [vmem:[#allocation2 + $0x10] sm:$0xff]
    %v1492 = vld [vmem:[#allocation2 + $0x18] sm:$0xff]
    %v1493 = vld [vmem:[%s53 + $0x8] sm:$0xff]
    %v1494 = vld [vmem:[%s53 + $0x10] sm:$0xff]
    %v1495 = vld [vmem:[%s53 + $0x18] sm:$0xff]
    %v1496 = vmul.f32 %v1490, %v419
    %v1497 = vmul.f32 %v1491, %v422
    %v1498 = vmul.f32 %v1492, %v421
    %v1499 = vmul.f32 %v1493, %v419
    %v1500 = vmul.f32 %v1494, %v422
    %v1501 = vmul.f32 %v1495, %v421
    %1505 = vrot.lane.b32.xlu0 %v1496, 111
    %v1506 = vpop.permute.xlu0 %1505
    %1507 = vrot.lane.b32.xlu0 %v1497, 111
    %v1508 = vpop.permute.xlu0 %1507
    %1509 = vrot.lane.b32.xlu0 %v1498, 111
    %v1510 = vpop.permute.xlu0 %1509
    %v1511 = vsel %vm75, %v1506, %v1508
    %v1512 = vsel %vm75, %v1508, %v1510
    %1515 = vst [vmem:[#allocation3 + $0x100] sm:$0xff] %v1511
    %1516 = vst [vmem:[#allocation3 + $0x108] sm:$0xff] %v1512
    %1520 = vrot.lane.b32.xlu0 %v1499, 111
    %v1521 = vpop.permute.xlu0 %1520
    %1522 = vrot.lane.b32.xlu0 %v1500, 111
    %v1523 = vpop.permute.xlu0 %1522
    %1524 = vrot.lane.b32.xlu0 %v1501, 111
    %v1525 = vpop.permute.xlu0 %1524
    %v1526 = vsel %vm75, %v1521, %v1523
    %v1527 = vsel %vm75, %v1523, %v1525
    %1530 = vst [vmem:[#allocation3 + $0x110] sm:$0xff] %v1526
    %1531 = vst [vmem:[#allocation3 + $0x118] sm:$0xff] %v1527
    %v1532 = vld [vmem:[#allocation4] sm:$0xff]
    %v1533 = vld [vmem:[#allocation4 + $0x8] sm:$0xff]
    %v1534 = vld [vmem:[#allocation4 + $0x10] sm:$0xff]
    %v1535 = vld [vmem:[#allocation4 + $0x18] sm:$0xff]
    %v1536 = vld [vmem:[#allocation4 + $0x20] sm:$0xff]
    %v1537 = vld [vmem:[#allocation4 + $0x28] sm:$0xff]
    %v1538 = vld [vmem:[#allocation4 + $0x30] sm:$0xff]
    %v1539 = vld [vmem:[#allocation4 + $0x38] sm:$0xff]
    %v1540 = vld [vmem:[#allocation3] sm:$0xff]
    %v1541 = vld [vmem:[#allocation3 + $0x8] sm:$0xff]
    %v1542 = vld [vmem:[#allocation3 + $0x10] sm:$0xff]
    %v1543 = vld [vmem:[#allocation3 + $0x18] sm:$0xff]
    %v1544 = vld [vmem:[#allocation3 + $0x20] sm:$0xff]
    %v1545 = vld [vmem:[#allocation3 + $0x28] sm:$0xff]
    %v1546 = vld [vmem:[#allocation3 + $0x30] sm:$0xff]
    %v1547 = vld [vmem:[#allocation3 + $0x38] sm:$0xff]
    %v1548 = vld [vmem:[#allocation3 + $0x40] sm:$0xff]
    %v1549 = vld [vmem:[#allocation3 + $0x48] sm:$0xff]
    %v1550 = vld [vmem:[#allocation3 + $0x50] sm:$0xff]
    %v1551 = vld [vmem:[#allocation3 + $0x58] sm:$0xff]
    %v1552 = vld [vmem:[#allocation3 + $0x60] sm:$0xff]
    %v1553 = vld [vmem:[#allocation3 + $0x68] sm:$0xff]
    %v1554 = vld [vmem:[#allocation3 + $0x70] sm:$0xff]
    %v1555 = vld [vmem:[#allocation3 + $0x78] sm:$0xff]
    %v1556 = vld [vmem:[#allocation3 + $0x80] sm:$0xff]
    %v1557 = vld [vmem:[#allocation3 + $0x88] sm:$0xff]
    %v1558 = vld [vmem:[#allocation3 + $0x90] sm:$0xff]
    %v1559 = vld [vmem:[#allocation3 + $0x98] sm:$0xff]
    %v1560 = vld [vmem:[#allocation3 + $0xa0] sm:$0xff]
    %v1561 = vld [vmem:[#allocation3 + $0xa8] sm:$0xff]
    %v1562 = vld [vmem:[#allocation3 + $0xb0] sm:$0xff]
    %v1563 = vld [vmem:[#allocation3 + $0xb8] sm:$0xff]
    %v1564 = vld [vmem:[#allocation3 + $0xc0] sm:$0xff]
    %v1565 = vld [vmem:[#allocation3 + $0xc8] sm:$0xff]
    %v1566 = vld [vmem:[#allocation3 + $0xd0] sm:$0xff]
    %v1567 = vld [vmem:[#allocation3 + $0xd8] sm:$0xff]
    %v1568 = vld [vmem:[#allocation3 + $0xe0] sm:$0xff]
    %v1569 = vld [vmem:[#allocation3 + $0xe8] sm:$0xff]
    %v1570 = vld [vmem:[#allocation3 + $0xf0] sm:$0xff]
    %v1571 = vld [vmem:[#allocation3 + $0xf8] sm:$0xff]
    %v1572 = vld [vmem:[#allocation3 + $0x100] sm:$0xff]
    %v1573 = vld [vmem:[#allocation3 + $0x108] sm:$0xff]
    %v1574 = vld [vmem:[#allocation3 + $0x110] sm:$0xff]
    %v1575 = vld [vmem:[#allocation3 + $0x118] sm:$0xff]
    %v1577 = vsel %vm506, %v1532, 0
    %v1580 = vsel %vm506, %v1533, 0
    %v1583 = vsel %vm506, %v1534, 0
    %v1586 = vsel %vm506, %v1535, 0
    %v1589 = vsel %vm506, %v1536, 0
    %v1592 = vsel %vm506, %v1537, 0
    %v1595 = vsel %vm506, %v1538, 0
    %v1598 = vsel %vm506, %v1539, 0
    %1600 = vmatprep.subr.mxu0 %v1541
    %1601 = vmatpush1.msra.mxu0 %v1540
    %1602 = vmatprep.subr.mxu0 %v1545
    %1603 = vmatpush1.msra.mxu0 %v1544
    %1604 = vmatprep.subr.mxu0 %v1549
    %1605 = vmatpush1.msra.mxu0 %v1548
    %1606 = vmatprep.subr.mxu0 %v1553
    %1607 = vmatpush1.msra.mxu0 %v1552
    %1608 = vmatprep.subr.mxu0 %v1557
    %1609 = vmatpush1.msra.mxu0 %v1556
    %1610 = vmatprep.subr.mxu0 %v1561
    %1611 = vmatpush1.msra.mxu0 %v1560
    %1612 = vmatprep.subr.mxu0 %v1565
    %1613 = vmatpush1.msra.mxu0 %v1564
    %1614 = vmatprep.subr.mxu0 %v1569
    %1615 = vmatpush1.msra.mxu0 %v1568
    %1616 = vmatprep.subr.mxu0 %v1573
    %1617 = vmatpush1.msra.mxu0 %v1572
    %1618 = vmatprep.subr.mxu0 0.0
    %1619 = vmatpush1.msra.mxu0 0.0
    %1620 = vmatprep.subr.mxu0 0.0
    %1621 = vmatpush1.msra.mxu0 0.0
    %1622 = vmatprep.subr.mxu0 0.0
    %1623 = vmatpush1.msra.mxu0 0.0
    %1624 = vmatprep.subr.mxu0 0.0
    %1625 = vmatpush1.msra.mxu0 0.0
    %1626 = vmatprep.subr.mxu0 0.0
    %1627 = vmatpush1.msra.mxu0 0.0
    %1628 = vmatprep.subr.mxu0 0.0
    %1629 = vmatpush1.msra.mxu0 0.0
    %1630 = vmatprep.subr.mxu0 0.0
    %1631 = vmatpush1.msra.mxu0 0.0
    %1632 = vmatprep.subr.mxu0 0.0
    %1633 = vmatpush1.msra.mxu0 0.0
    %1634 = vmatprep.subr.mxu0 0.0
    %1635 = vmatpush1.msra.mxu0 0.0
    %1636 = vmatprep.subr.mxu0 0.0
    %1637 = vmatpush1.msra.mxu0 0.0
    %1638 = vmatprep.subr.mxu0 0.0
    %1639 = vmatpush1.msra.mxu0 0.0
    %1640 = vmatprep.subr.mxu0 0.0
    %1641 = vmatpush1.msra.mxu0 0.0
    %1642 = vmatprep.subr.mxu0 0.0
    %1643 = vmatpush1.msra.mxu0 0.0
    %1644 = vmatprep.subr.mxu0 0.0
    %1645 = vmatpush1.msra.mxu0 0.0
    %1646 = vmatprep.subr.mxu0 0.0
    %1647 = vmatpush1.msra.mxu0 0.0
    %1648 = vmatprep.subr.mxu0 0.0
    %1649 = vmatpush1.msra.mxu0 0.0
    %1650 = vmatprep.subr.mxu0 0.0
    %1651 = vmatpush1.msra.mxu0 0.0
    %1652 = vmatprep.subr.mxu0 0.0
    %1653 = vmatpush1.msra.mxu0 0.0
    %1654 = vmatprep.subr.mxu0 0.0
    %1655 = vmatpush1.msra.mxu0 0.0
    %1656 = vmatprep.subr.mxu0 0.0
    %1657 = vmatpush1.msra.mxu0 0.0
    %1658 = vmatprep.subr.mxu0 0.0
    %1659 = vmatpush1.msra.mxu0 0.0
    %1660 = vmatprep.subr.mxu0 0.0
    %1661 = vmatpush1.msra.mxu0 0.0
    %1662 = vmatprep.subr.mxu0 0.0
    %1663 = vmatpush1.msra.mxu0 0.0
    %1664 = vmatprep.mubr.f32.mxu0 0.0
    %1665 = vmatmul.mubr.f32.gmra.mrb[0].mxu0 %v1577
    %v1666 = vpop.f32.mrb[0].mxu0
    %v1667 = vadd.f32 0.0, %v1666
    %v1668 = vpop.f32.mrb[0].mxu0
    %v1669 = vadd.f32 0.0, %v1668
    %1670 = vmatprep.mubr.f32.mxu0 0.0
    %1671 = vmatmul.mubr.f32.gmra.mrb[0].mxu0 %v1580
    %v1672 = vpop.f32.mrb[0].mxu0
    %v1673 = vadd.f32 0.0, %v1672
    %v1674 = vpop.f32.mrb[0].mxu0
    %v1675 = vadd.f32 0.0, %v1674
    %1676 = vmatprep.mubr.f32.mxu0 0.0
    %1677 = vmatmul.mubr.f32.gmra.mrb[0].mxu0 %v1583
    %v1678 = vpop.f32.mrb[0].mxu0
    %v1679 = vadd.f32 0.0, %v1678
    %v1680 = vpop.f32.mrb[0].mxu0
    %v1681 = vadd.f32 0.0, %v1680
    %1682 = vmatprep.mubr.f32.mxu0 0.0
    %1683 = vmatmul.mubr.f32.gmra.mrb[0].mxu0 %v1586
    %v1684 = vpop.f32.mrb[0].mxu0
    %v1685 = vadd.f32 0.0, %v1684
    %v1686 = vpop.f32.mrb[0].mxu0
    %v1687 = vadd.f32 0.0, %v1686
    %1688 = vmatprep.mubr.f32.mxu0 0.0
    %1689 = vmatmul.mubr.f32.gmra.mrb[0].mxu0 %v1589
    %v1690 = vpop.f32.mrb[0].mxu0
    %v1691 = vadd.f32 0.0, %v1690
    %v1692 = vpop.f32.mrb[0].mxu0
    %v1693 = vadd.f32 0.0, %v1692
    %1694 = vmatprep.mubr.f32.mxu0 0.0
    %1695 = vmatmul.mubr.f32.gmra.mrb[0].mxu0 %v1592
    %v1696 = vpop.f32.mrb[0].mxu0
    %v1697 = vadd.f32 0.0, %v1696
    %v1698 = vpop.f32.mrb[0].mxu0
    %v1699 = vadd.f32 0.0, %v1698
    %1700 = vmatprep.mubr.f32.mxu0 0.0
    %1701 = vmatmul.mubr.f32.gmra.mrb[0].mxu0 %v1595
    %v1702 = vpop.f32.mrb[0].mxu0
    %v1703 = vadd.f32 0.0, %v1702
    %v1704 = vpop.f32.mrb[0].mxu0
    %v1705 = vadd.f32 0.0, %v1704
    %1706 = vmatprep.mubr.f32.mxu0 0.0
    %1707 = vmatmul.mubr.f32.gmra.mrb[0].mxu0 %v1598
    %v1708 = vpop.f32.mrb[0].mxu0
    %v1709 = vadd.f32 0.0, %v1708
    %v1710 = vpop.f32.mrb[0].mxu0
    %v1711 = vadd.f32 0.0, %v1710
    %1712 = vdwg.mxu0
    %1713 = vmatprep.subr.mxu0 %v1543
    %1714 = vmatpush1.msra.mxu0 %v1542
    %1715 = vmatprep.subr.mxu0 %v1547
    %1716 = vmatpush1.msra.mxu0 %v1546
    %1717 = vmatprep.subr.mxu0 %v1551
    %1718 = vmatpush1.msra.mxu0 %v1550
    %1719 = vmatprep.subr.mxu0 %v1555
    %1720 = vmatpush1.msra.mxu0 %v1554
    %1721 = vmatprep.subr.mxu0 %v1559
    %1722 = vmatpush1.msra.mxu0 %v1558
    %1723 = vmatprep.subr.mxu0 %v1563
    %1724 = vmatpush1.msra.mxu0 %v1562
    %1725 = vmatprep.subr.mxu0 %v1567
    %1726 = vmatpush1.msra.mxu0 %v1566
    %1727 = vmatprep.subr.mxu0 %v1571
    %1728 = vmatpush1.msra.mxu0 %v1570
    %1729 = vmatprep.subr.mxu0 %v1575
    %1730 = vmatpush1.msra.mxu0 %v1574
    %1731 = vmatprep.subr.mxu0 0.0
    %1732 = vmatpush1.msra.mxu0 0.0
    %1733 = vmatprep.subr.mxu0 0.0
    %1734 = vmatpush1.msra.mxu0 0.0
    %1735 = vmatprep.subr.mxu0 0.0
    %1736 = vmatpush1.msra.mxu0 0.0
    %1737 = vmatprep.subr.mxu0 0.0
    %1738 = vmatpush1.msra.mxu0 0.0
    %1739 = vmatprep.subr.mxu0 0.0
    %1740 = vmatpush1.msra.mxu0 0.0
    %1741 = vmatprep.subr.mxu0 0.0
    %1742 = vmatpush1.msra.mxu0 0.0
    %1743 = vmatprep.subr.mxu0 0.0
    %1744 = vmatpush1.msra.mxu0 0.0
    %1745 = vmatprep.subr.mxu0 0.0
    %1746 = vmatpush1.msra.mxu0 0.0
    %1747 = vmatprep.subr.mxu0 0.0
    %1748 = vmatpush1.msra.mxu0 0.0
    %1749 = vmatprep.subr.mxu0 0.0
    %1750 = vmatpush1.msra.mxu0 0.0
    %1751 = vmatprep.subr.mxu0 0.0
    %1752 = vmatpush1.msra.mxu0 0.0
    %1753 = vmatprep.subr.mxu0 0.0
    %1754 = vmatpush1.msra.mxu0 0.0
    %1755 = vmatprep.subr.mxu0 0.0
    %1756 = vmatpush1.msra.mxu0 0.0
    %1757 = vmatprep.subr.mxu0 0.0
    %1758 = vmatpush1.msra.mxu0 0.0
    %1759 = vmatprep.subr.mxu0 0.0
    %1760 = vmatpush1.msra.mxu0 0.0
    %1761 = vmatprep.subr.mxu0 0.0
    %1762 = vmatpush1.msra.mxu0 0.0
    %1763 = vmatprep.subr.mxu0 0.0
    %1764 = vmatpush1.msra.mxu0 0.0
    %1765 = vmatprep.subr.mxu0 0.0
    %1766 = vmatpush1.msra.mxu0 0.0
    %1767 = vmatprep.subr.mxu0 0.0
    %1768 = vmatpush1.msra.mxu0 0.0
    %1769 = vmatprep.subr.mxu0 0.0
    %1770 = vmatpush1.msra.mxu0 0.0
    %1771 = vmatprep.subr.mxu0 0.0
    %1772 = vmatpush1.msra.mxu0 0.0
    %1773 = vmatprep.subr.mxu0 0.0
    %1774 = vmatpush1.msra.mxu0 0.0
    %1775 = vmatprep.subr.mxu0 0.0
    %1776 = vmatpush1.msra.mxu0 0.0
    %1777 = vmatprep.mubr.f32.mxu0 0.0
    %1778 = vmatmul.mubr.f32.gmra.mrb[0].mxu0 %v1577
    %v1779 = vpop.f32.mrb[0].mxu0
    %v1780 = vadd.f32 0.0, %v1779
    %v1781 = vpop.f32.mrb[0].mxu0
    %v1782 = vadd.f32 0.0, %v1781
    %1783 = vmatprep.mubr.f32.mxu0 0.0
    %1784 = vmatmul.mubr.f32.gmra.mrb[0].mxu0 %v1580
    %v1785 = vpop.f32.mrb[0].mxu0
    %v1786 = vadd.f32 0.0, %v1785
    %v1787 = vpop.f32.mrb[0].mxu0
    %v1788 = vadd.f32 0.0, %v1787
    %1789 = vmatprep.mubr.f32.mxu0 0.0
    %1790 = vmatmul.mubr.f32.gmra.mrb[0].mxu0 %v1583
    %v1791 = vpop.f32.mrb[0].mxu0
    %v1792 = vadd.f32 0.0, %v1791
    %v1793 = vpop.f32.mrb[0].mxu0
    %v1794 = vadd.f32 0.0, %v1793
    %1795 = vmatprep.mubr.f32.mxu0 0.0
    %1796 = vmatmul.mubr.f32.gmra.mrb[0].mxu0 %v1586
    %v1797 = vpop.f32.mrb[0].mxu0
    %v1798 = vadd.f32 0.0, %v1797
    %v1799 = vpop.f32.mrb[0].mxu0
    %v1800 = vadd.f32 0.0, %v1799
    %1801 = vmatprep.mubr.f32.mxu0 0.0
    %1802 = vmatmul.mubr.f32.gmra.mrb[0].mxu0 %v1589
    %v1803 = vpop.f32.mrb[0].mxu0
    %v1804 = vadd.f32 0.0, %v1803
    %v1805 = vpop.f32.mrb[0].mxu0
    %v1806 = vadd.f32 0.0, %v1805
    %1807 = vmatprep.mubr.f32.mxu0 0.0
    %1808 = vmatmul.mubr.f32.gmra.mrb[0].mxu0 %v1592
    %v1809 = vpop.f32.mrb[0].mxu0
    %v1810 = vadd.f32 0.0, %v1809
    %v1811 = vpop.f32.mrb[0].mxu0
    %v1812 = vadd.f32 0.0, %v1811
    %1813 = vmatprep.mubr.f32.mxu0 0.0
    %1814 = vmatmul.mubr.f32.gmra.mrb[0].mxu0 %v1595
    %v1815 = vpop.f32.mrb[0].mxu0
    %v1816 = vadd.f32 0.0, %v1815
    %v1817 = vpop.f32.mrb[0].mxu0
    %v1818 = vadd.f32 0.0, %v1817
    %1819 = vmatprep.mubr.f32.mxu0 0.0
    %1820 = vmatmul.mubr.f32.gmra.mrb[0].mxu0 %v1598
    %v1821 = vpop.f32.mrb[0].mxu0
    %v1822 = vadd.f32 0.0, %v1821
    %v1823 = vpop.f32.mrb[0].mxu0
    %v1824 = vadd.f32 0.0, %v1823
    %1825 = vdwg.mxu0
    %v1826 = vadd.f32 %v1667, %v1669
    %1827 = vadd.xlane.f32.xlu0 %v1826
    %v1828 = vpop.xlane.xlu0 %1827
    %v1829 = vadd.f32 %v1673, %v1675
    %1830 = vadd.xlane.f32.xlu0 %v1829
    %v1831 = vpop.xlane.xlu0 %1830
    %v1832 = vadd.f32 %v1679, %v1681
    %1833 = vadd.xlane.f32.xlu0 %v1832
    %v1834 = vpop.xlane.xlu0 %1833
    %v1835 = vadd.f32 %v1685, %v1687
    %1836 = vadd.xlane.f32.xlu0 %v1835
    %v1837 = vpop.xlane.xlu0 %1836
    %v1838 = vadd.f32 %v1691, %v1693
    %1839 = vadd.xlane.f32.xlu0 %v1838
    %v1840 = vpop.xlane.xlu0 %1839
    %v1841 = vadd.f32 %v1697, %v1699
    %1842 = vadd.xlane.f32.xlu0 %v1841
    %v1843 = vpop.xlane.xlu0 %1842
    %v1844 = vadd.f32 %v1703, %v1705
    %1845 = vadd.xlane.f32.xlu0 %v1844
    %v1846 = vpop.xlane.xlu0 %1845
    %v1847 = vadd.f32 %v1709, %v1711
    %1848 = vadd.xlane.f32.xlu0 %v1847
    %v1849 = vpop.xlane.xlu0 %1848
    %v1850 = vmul.f32 %v1828, 0.00390625
    %v1851 = vmul.f32 %v1831, 0.00390625
    %v1852 = vmul.f32 %v1834, 0.00390625
    %v1853 = vmul.f32 %v1837, 0.00390625
    %v1854 = vmul.f32 %v1840, 0.00390625
    %v1855 = vmul.f32 %v1843, 0.00390625
    %v1856 = vmul.f32 %v1846, 0.00390625
    %v1857 = vmul.f32 %v1849, 0.00390625
    %v1858 = vmul.f32 %v1667, %v1667
    %v1859 = vmul.f32 %v1669, %v1669
    %v1860 = vmul.f32 %v1673, %v1673
    %v1861 = vmul.f32 %v1675, %v1675
    %v1862 = vmul.f32 %v1679, %v1679
    %v1863 = vmul.f32 %v1681, %v1681
    %v1864 = vmul.f32 %v1685, %v1685
    %v1865 = vmul.f32 %v1687, %v1687
    %v1866 = vmul.f32 %v1691, %v1691
    %v1867 = vmul.f32 %v1693, %v1693
    %v1868 = vmul.f32 %v1697, %v1697
    %v1869 = vmul.f32 %v1699, %v1699
    %v1870 = vmul.f32 %v1703, %v1703
    %v1871 = vmul.f32 %v1705, %v1705
    %v1872 = vmul.f32 %v1709, %v1709
    %v1873 = vmul.f32 %v1711, %v1711
    %v1874 = vadd.f32 %v1858, %v1859
    %1875 = vadd.xlane.f32.xlu0 %v1874
    %v1876 = vpop.xlane.xlu0 %1875
    %v1877 = vadd.f32 %v1860, %v1861
    %1878 = vadd.xlane.f32.xlu0 %v1877
    %v1879 = vpop.xlane.xlu0 %1878
    %v1880 = vadd.f32 %v1862, %v1863
    %1881 = vadd.xlane.f32.xlu0 %v1880
    %v1882 = vpop.xlane.xlu0 %1881
    %v1883 = vadd.f32 %v1864, %v1865
    %1884 = vadd.xlane.f32.xlu0 %v1883
    %v1885 = vpop.xlane.xlu0 %1884
    %v1886 = vadd.f32 %v1866, %v1867
    %1887 = vadd.xlane.f32.xlu0 %v1886
    %v1888 = vpop.xlane.xlu0 %1887
    %v1889 = vadd.f32 %v1868, %v1869
    %1890 = vadd.xlane.f32.xlu0 %v1889
    %v1891 = vpop.xlane.xlu0 %1890
    %v1892 = vadd.f32 %v1870, %v1871
    %1893 = vadd.xlane.f32.xlu0 %v1892
    %v1894 = vpop.xlane.xlu0 %1893
    %v1895 = vadd.f32 %v1872, %v1873
    %1896 = vadd.xlane.f32.xlu0 %v1895
    %v1897 = vpop.xlane.xlu0 %1896
    %v1898 = vmul.f32 %v1876, 0.00390625
    %v1899 = vmul.f32 %v1879, 0.00390625
    %v1900 = vmul.f32 %v1882, 0.00390625
    %v1901 = vmul.f32 %v1885, 0.00390625
    %v1902 = vmul.f32 %v1888, 0.00390625
    %v1903 = vmul.f32 %v1891, 0.00390625
    %v1904 = vmul.f32 %v1894, 0.00390625
    %v1905 = vmul.f32 %v1897, 0.00390625
    %v1906 = vmul.f32 %v1850, %v1850
    %v1907 = vmul.f32 %v1851, %v1851
    %v1908 = vmul.f32 %v1852, %v1852
    %v1909 = vmul.f32 %v1853, %v1853
    %v1910 = vmul.f32 %v1854, %v1854
    %v1911 = vmul.f32 %v1855, %v1855
    %v1912 = vmul.f32 %v1856, %v1856
    %v1913 = vmul.f32 %v1857, %v1857
    %v1914 = vsub.f32 %v1898, %v1906
    %v1915 = vsub.f32 %v1899, %v1907
    %v1916 = vsub.f32 %v1900, %v1908
    %v1917 = vsub.f32 %v1901, %v1909
    %v1918 = vsub.f32 %v1902, %v1910
    %v1919 = vsub.f32 %v1903, %v1911
    %v1920 = vsub.f32 %v1904, %v1912
    %v1921 = vsub.f32 %v1905, %v1913
    %v1922 = vsub.f32 %v1667, %v1850
    %v1923 = vsub.f32 %v1669, %v1850
    %v1924 = vsub.f32 %v1673, %v1851
    %v1925 = vsub.f32 %v1675, %v1851
    %v1926 = vsub.f32 %v1679, %v1852
    %v1927 = vsub.f32 %v1681, %v1852
    %v1928 = vsub.f32 %v1685, %v1853
    %v1929 = vsub.f32 %v1687, %v1853
    %v1930 = vsub.f32 %v1691, %v1854
    %v1931 = vsub.f32 %v1693, %v1854
    %v1932 = vsub.f32 %v1697, %v1855
    %v1933 = vsub.f32 %v1699, %v1855
    %v1934 = vsub.f32 %v1703, %v1856
    %v1935 = vsub.f32 %v1705, %v1856
    %v1936 = vsub.f32 %v1709, %v1857
    %v1937 = vsub.f32 %v1711, %v1857
    %v1938 = vadd.f32 %v1914, 1e-05
    %v1939 = vadd.f32 %v1915, 1e-05
    %v1940 = vadd.f32 %v1916, 1e-05
    %v1941 = vadd.f32 %v1917, 1e-05
    %v1942 = vadd.f32 %v1918, 1e-05
    %v1943 = vadd.f32 %v1919, 1e-05
    %v1944 = vadd.f32 %v1920, 1e-05
    %v1945 = vadd.f32 %v1921, 1e-05
    %v1946 = vrsqrt.pop %v1938
    %v1947 = vrsqrt.pop %v1939
    %v1948 = vrsqrt.pop %v1940
    %v1949 = vrsqrt.pop %v1941
    %v1950 = vrsqrt.pop %v1942
    %v1951 = vrsqrt.pop %v1943
    %v1952 = vrsqrt.pop %v1944
    %v1953 = vrsqrt.pop %v1945
    %v1954 = vmul.f32 %v1922, %v1946
    %v1955 = vmul.f32 %v1923, %v1946
    %v1956 = vmul.f32 %v1924, %v1947
    %v1957 = vmul.f32 %v1925, %v1947
    %v1958 = vmul.f32 %v1926, %v1948
    %v1959 = vmul.f32 %v1927, %v1948
    %v1960 = vmul.f32 %v1928, %v1949
    %v1961 = vmul.f32 %v1929, %v1949
    %v1962 = vmul.f32 %v1930, %v1950
    %v1963 = vmul.f32 %v1931, %v1950
    %v1964 = vmul.f32 %v1932, %v1951
    %v1965 = vmul.f32 %v1933, %v1951
    %v1966 = vmul.f32 %v1934, %v1952
    %v1967 = vmul.f32 %v1935, %v1952
    %v1968 = vmul.f32 %v1936, %v1953
    %v1969 = vmul.f32 %v1937, %v1953
    %v1970 = vmax.f32 %v1954, 0.0
    %v1971 = vmax.f32 %v1955, 0.0
    %v1972 = vmax.f32 %v1956, 0.0
    %v1973 = vmax.f32 %v1957, 0.0
    %v1974 = vmax.f32 %v1958, 0.0
    %v1975 = vmax.f32 %v1959, 0.0
    %v1976 = vmax.f32 %v1960, 0.0
    %v1977 = vmax.f32 %v1961, 0.0
    %v1978 = vmax.f32 %v1962, 0.0
    %v1979 = vmax.f32 %v1963, 0.0
    %v1980 = vmax.f32 %v1964, 0.0
    %v1981 = vmax.f32 %v1965, 0.0
    %v1982 = vmax.f32 %v1966, 0.0
    %v1983 = vmax.f32 %v1967, 0.0
    %v1984 = vmax.f32 %v1968, 0.0
    %v1985 = vmax.f32 %v1969, 0.0
    %v1986 = vadd.f32 %v1780, %v1782
    %1987 = vadd.xlane.f32.xlu0 %v1986
    %v1988 = vpop.xlane.xlu0 %1987
    %v1989 = vadd.f32 %v1786, %v1788
    %1990 = vadd.xlane.f32.xlu0 %v1989
    %v1991 = vpop.xlane.xlu0 %1990
    %v1992 = vadd.f32 %v1792, %v1794
    %1993 = vadd.xlane.f32.xlu0 %v1992
    %v1994 = vpop.xlane.xlu0 %1993
    %v1995 = vadd.f32 %v1798, %v1800
    %1996 = vadd.xlane.f32.xlu0 %v1995
    %v1997 = vpop.xlane.xlu0 %1996
    %v1998 = vadd.f32 %v1804, %v1806
    %1999 = vadd.xlane.f32.xlu0 %v1998
    %v2000 = vpop.xlane.xlu0 %1999
    %v2001 = vadd.f32 %v1810, %v1812
    %2002 = vadd.xlane.f32.xlu0 %v2001
    %v2003 = vpop.xlane.xlu0 %2002
    %v2004 = vadd.f32 %v1816, %v1818
    %2005 = vadd.xlane.f32.xlu0 %v2004
    %v2006 = vpop.xlane.xlu0 %2005
    %v2007 = vadd.f32 %v1822, %v1824
    %2008 = vadd.xlane.f32.xlu0 %v2007
    %v2009 = vpop.xlane.xlu0 %2008
    %v2010 = vmul.f32 %v1988, 0.00390625
    %v2011 = vmul.f32 %v1991, 0.00390625
    %v2012 = vmul.f32 %v1994, 0.00390625
    %v2013 = vmul.f32 %v1997, 0.00390625
    %v2014 = vmul.f32 %v2000, 0.00390625
    %v2015 = vmul.f32 %v2003, 0.00390625
    %v2016 = vmul.f32 %v2006, 0.00390625
    %v2017 = vmul.f32 %v2009, 0.00390625
    %v2018 = vmul.f32 %v1780, %v1780
    %v2019 = vmul.f32 %v1782, %v1782
    %v2020 = vmul.f32 %v1786, %v1786
    %v2021 = vmul.f32 %v1788, %v1788
    %v2022 = vmul.f32 %v1792, %v1792
    %v2023 = vmul.f32 %v1794, %v1794
    %v2024 = vmul.f32 %v1798, %v1798
    %v2025 = vmul.f32 %v1800, %v1800
    %v2026 = vmul.f32 %v1804, %v1804
    %v2027 = vmul.f32 %v1806, %v1806
    %v2028 = vmul.f32 %v1810, %v1810
    %v2029 = vmul.f32 %v1812, %v1812
    %v2030 = vmul.f32 %v1816, %v1816
    %v2031 = vmul.f32 %v1818, %v1818
    %v2032 = vmul.f32 %v1822, %v1822
    %v2033 = vmul.f32 %v1824, %v1824
    %v2034 = vadd.f32 %v2018, %v2019
    %2035 = vadd.xlane.f32.xlu0 %v2034
    %v2036 = vpop.xlane.xlu0 %2035
    %v2037 = vadd.f32 %v2020, %v2021
    %2038 = vadd.xlane.f32.xlu0 %v2037
    %v2039 = vpop.xlane.xlu0 %2038
    %v2040 = vadd.f32 %v2022, %v2023
    %2041 = vadd.xlane.f32.xlu0 %v2040
    %v2042 = vpop.xlane.xlu0 %2041
    %v2043 = vadd.f32 %v2024, %v2025
    %2044 = vadd.xlane.f32.xlu0 %v2043
    %v2045 = vpop.xlane.xlu0 %2044
    %v2046 = vadd.f32 %v2026, %v2027
    %2047 = vadd.xlane.f32.xlu0 %v2046
    %v2048 = vpop.xlane.xlu0 %2047
    %v2049 = vadd.f32 %v2028, %v2029
    %2050 = vadd.xlane.f32.xlu0 %v2049
    %v2051 = vpop.xlane.xlu0 %2050
    %v2052 = vadd.f32 %v2030, %v2031
    %2053 = vadd.xlane.f32.xlu0 %v2052
    %v2054 = vpop.xlane.xlu0 %2053
    %v2055 = vadd.f32 %v2032, %v2033
    %2056 = vadd.xlane.f32.xlu0 %v2055
    %v2057 = vpop.xlane.xlu0 %2056
    %v2058 = vmul.f32 %v2036, 0.00390625
    %v2059 = vmul.f32 %v2039, 0.00390625
    %v2060 = vmul.f32 %v2042, 0.00390625
    %v2061 = vmul.f32 %v2045, 0.00390625
    %v2062 = vmul.f32 %v2048, 0.00390625
    %v2063 = vmul.f32 %v2051, 0.00390625
    %v2064 = vmul.f32 %v2054, 0.00390625
    %v2065 = vmul.f32 %v2057, 0.00390625
    %v2066 = vmul.f32 %v2010, %v2010
    %v2067 = vmul.f32 %v2011, %v2011
    %v2068 = vmul.f32 %v2012, %v2012
    %v2069 = vmul.f32 %v2013, %v2013
    %v2070 = vmul.f32 %v2014, %v2014
    %v2071 = vmul.f32 %v2015, %v2015
    %v2072 = vmul.f32 %v2016, %v2016
    %v2073 = vmul.f32 %v2017, %v2017
    %v2074 = vsub.f32 %v2058, %v2066
    %v2075 = vsub.f32 %v2059, %v2067
    %v2076 = vsub.f32 %v2060, %v2068
    %v2077 = vsub.f32 %v2061, %v2069
    %v2078 = vsub.f32 %v2062, %v2070
    %v2079 = vsub.f32 %v2063, %v2071
    %v2080 = vsub.f32 %v2064, %v2072
    %v2081 = vsub.f32 %v2065, %v2073
    %v2082 = vsub.f32 %v1780, %v2010
    %v2083 = vsub.f32 %v1782, %v2010
    %v2084 = vsub.f32 %v1786, %v2011
    %v2085 = vsub.f32 %v1788, %v2011
    %v2086 = vsub.f32 %v1792, %v2012
    %v2087 = vsub.f32 %v1794, %v2012
    %v2088 = vsub.f32 %v1798, %v2013
    %v2089 = vsub.f32 %v1800, %v2013
    %v2090 = vsub.f32 %v1804, %v2014
    %v2091 = vsub.f32 %v1806, %v2014
    %v2092 = vsub.f32 %v1810, %v2015
    %v2093 = vsub.f32 %v1812, %v2015
    %v2094 = vsub.f32 %v1816, %v2016
    %v2095 = vsub.f32 %v1818, %v2016
    %v2096 = vsub.f32 %v1822, %v2017
    %v2097 = vsub.f32 %v1824, %v2017
    %v2098 = vadd.f32 %v2074, 1e-05
    %v2099 = vadd.f32 %v2075, 1e-05
    %v2100 = vadd.f32 %v2076, 1e-05
    %v2101 = vadd.f32 %v2077, 1e-05
    %v2102 = vadd.f32 %v2078, 1e-05
    %v2103 = vadd.f32 %v2079, 1e-05
    %v2104 = vadd.f32 %v2080, 1e-05
    %v2105 = vadd.f32 %v2081, 1e-05
    %v2106 = vrsqrt.pop %v2098
    %v2107 = vrsqrt.pop %v2099
    %v2108 = vrsqrt.pop %v2100
    %v2109 = vrsqrt.pop %v2101
    %v2110 = vrsqrt.pop %v2102
    %v2111 = vrsqrt.pop %v2103
    %v2112 = vrsqrt.pop %v2104
    %v2113 = vrsqrt.pop %v2105
    %v2114 = vmul.f32 %v2082, %v2106
    %v2115 = vmul.f32 %v2083, %v2106
    %v2116 = vmul.f32 %v2084, %v2107
    %v2117 = vmul.f32 %v2085, %v2107
    %v2118 = vmul.f32 %v2086, %v2108
    %v2119 = vmul.f32 %v2087, %v2108
    %v2120 = vmul.f32 %v2088, %v2109
    %v2121 = vmul.f32 %v2089, %v2109
    %v2122 = vmul.f32 %v2090, %v2110
    %v2123 = vmul.f32 %v2091, %v2110
    %v2124 = vmul.f32 %v2092, %v2111
    %v2125 = vmul.f32 %v2093, %v2111
    %v2126 = vmul.f32 %v2094, %v2112
    %v2127 = vmul.f32 %v2095, %v2112
    %v2128 = vmul.f32 %v2096, %v2113
    %v2129 = vmul.f32 %v2097, %v2113
    %v2130 = vmax.f32 %v2114, 0.0
    %v2131 = vmax.f32 %v2115, 0.0
    %v2132 = vmax.f32 %v2116, 0.0
    %v2133 = vmax.f32 %v2117, 0.0
    %v2134 = vmax.f32 %v2118, 0.0
    %v2135 = vmax.f32 %v2119, 0.0
    %v2136 = vmax.f32 %v2120, 0.0
    %v2137 = vmax.f32 %v2121, 0.0
    %v2138 = vmax.f32 %v2122, 0.0
    %v2139 = vmax.f32 %v2123, 0.0
    %v2140 = vmax.f32 %v2124, 0.0
    %v2141 = vmax.f32 %v2125, 0.0
    %v2142 = vmax.f32 %v2126, 0.0
    %v2143 = vmax.f32 %v2127, 0.0
    %v2144 = vmax.f32 %v2128, 0.0
    %v2145 = vmax.f32 %v2129, 0.0
    %v2146 = vsub.f32 %v1970, %v2130
    %v2147 = vsub.f32 %v1971, %v2131
    %v2148 = vsub.f32 %v1972, %v2132
    %v2149 = vsub.f32 %v1973, %v2133
    %v2150 = vsub.f32 %v1974, %v2134
    %v2151 = vsub.f32 %v1975, %v2135
    %v2152 = vsub.f32 %v1976, %v2136
    %v2153 = vsub.f32 %v1977, %v2137
    %v2154 = vsub.f32 %v1978, %v2138
    %v2155 = vsub.f32 %v1979, %v2139
    %v2156 = vsub.f32 %v1980, %v2140
    %v2157 = vsub.f32 %v1981, %v2141
    %v2158 = vsub.f32 %v1982, %v2142
    %v2159 = vsub.f32 %v1983, %v2143
    %v2160 = vsub.f32 %v1984, %v2144
    %v2161 = vsub.f32 %v1985, %v2145
    %v2162 = vmul.f32 %v2146, %v2146
    %v2163 = vmul.f32 %v2147, %v2147
    %v2164 = vmul.f32 %v2148, %v2148
    %v2165 = vmul.f32 %v2149, %v2149
    %v2166 = vmul.f32 %v2150, %v2150
    %v2167 = vmul.f32 %v2151, %v2151
    %v2168 = vmul.f32 %v2152, %v2152
    %v2169 = vmul.f32 %v2153, %v2153
    %v2170 = vmul.f32 %v2154, %v2154
    %v2171 = vmul.f32 %v2155, %v2155
    %v2172 = vmul.f32 %v2156, %v2156
    %v2173 = vmul.f32 %v2157, %v2157
    %v2174 = vmul.f32 %v2158, %v2158
    %v2175 = vmul.f32 %v2159, %v2159
    %v2176 = vmul.f32 %v2160, %v2160
    %v2177 = vmul.f32 %v2161, %v2161
    %2178 = vmatprep.subr.mxu0 %v2163
    %2179 = vmatpush1.msra.mxu0 %v2162
    %2180 = vmatprep.subr.mxu0 %v2165
    %2181 = vmatpush1.msra.mxu0 %v2164
    %2182 = vmatprep.subr.mxu0 %v2167
    %2183 = vmatpush1.msra.mxu0 %v2166
    %2184 = vmatprep.subr.mxu0 %v2169
    %2185 = vmatpush1.msra.mxu0 %v2168
    %2186 = vmatprep.subr.mxu0 %v2171
    %2187 = vmatpush1.msra.mxu0 %v2170
    %2188 = vmatprep.subr.mxu0 %v2173
    %2189 = vmatpush1.msra.mxu0 %v2172
    %2190 = vmatprep.subr.mxu0 %v2175
    %2191 = vmatpush1.msra.mxu0 %v2174
    %2192 = vmatprep.subr.mxu0 %v2177
    %2193 = vmatpush1.msra.mxu0 %v2176
    %2194 = vmatprep.subr.mxu0 0.0
    %2195 = vmatpush1.msra.mxu0 0.0
    %2196 = vmatprep.subr.mxu0 0.0
    %2197 = vmatpush1.msra.mxu0 0.0
    %2198 = vmatprep.subr.mxu0 0.0
    %2199 = vmatpush1.msra.mxu0 0.0
    %2200 = vmatprep.subr.mxu0 0.0
    %2201 = vmatpush1.msra.mxu0 0.0
    %2202 = vmatprep.subr.mxu0 0.0
    %2203 = vmatpush1.msra.mxu0 0.0
    %2204 = vmatprep.subr.mxu0 0.0
    %2205 = vmatpush1.msra.mxu0 0.0
    %2206 = vmatprep.subr.mxu0 0.0
    %2207 = vmatpush1.msra.mxu0 0.0
    %2208 = vmatprep.subr.mxu0 0.0
    %2209 = vmatpush1.msra.mxu0 0.0
    %2210 = vmatprep.subr.mxu0 0.0
    %2211 = vmatpush1.msra.mxu0 0.0
    %2212 = vmatprep.subr.mxu0 0.0
    %2213 = vmatpush1.msra.mxu0 0.0
    %2214 = vmatprep.subr.mxu0 0.0
    %2215 = vmatpush1.msra.mxu0 0.0
    %2216 = vmatprep.subr.mxu0 0.0
    %2217 = vmatpush1.msra.mxu0 0.0
    %2218 = vmatprep.subr.mxu0 0.0
    %2219 = vmatpush1.msra.mxu0 0.0
    %2220 = vmatprep.subr.mxu0 0.0
    %2221 = vmatpush1.msra.mxu0 0.0
    %2222 = vmatprep.subr.mxu0 0.0
    %2223 = vmatpush1.msra.mxu0 0.0
    %2224 = vmatprep.subr.mxu0 0.0
    %2225 = vmatpush1.msra.mxu0 0.0
    %2226 = vmatprep.subr.mxu0 0.0
    %2227 = vmatpush1.msra.mxu0 0.0
    %2228 = vmatprep.subr.mxu0 0.0
    %2229 = vmatpush1.msra.mxu0 0.0
    %2230 = vmatprep.subr.mxu0 0.0
    %2231 = vmatpush1.msra.mxu0 0.0
    %2232 = vmatprep.subr.mxu0 0.0
    %2233 = vmatpush1.msra.mxu0 0.0
    %2234 = vmatprep.subr.mxu0 0.0
    %2235 = vmatpush1.msra.mxu0 0.0
    %2236 = vmatprep.subr.mxu0 0.0
    %2237 = vmatpush1.msra.mxu0 0.0
    %2238 = vmatprep.subr.mxu0 0.0
    %2239 = vmatpush1.msra.mxu0 0.0
    %2240 = vmatprep.subr.mxu0 0.0
    %2241 = vmatpush1.msra.mxu0 0.0
    %2242 = vmatprep.mubr.f32.mxu0 0.0
    %2243 = vmatmul.mubr.f32.gmra.mrb[0].mxu0 %v1111
    %v2244 = vpop.f32.mrb[0].mxu0
    %v2245 = vadd.f32 0.0, %v2244
    %v2246 = vpop.f32.mrb[0].mxu0
    %v2247 = vadd.f32 0.0, %v2246
    %2248 = vdwg.mxu0
    %v2249 = vadd.f32 %v2245, %v2247
    %v2250 = vadd.f32 %v1185, %v2249
    %2251 = vst [vmem:[#allocation7] sm:$0xff] %v2250
    // Predicated region
    $region22: #{tpu_custom_call.1} parent=1 // pred_check
      _
    $region23: #{tpu_custom_call.1} parent=1 // pred_check_branch
      %2253 = sbr.rel (0) target = $region25
    $region24: #{tpu_custom_call.1} parent=1 // pred_region
      %s2255 = ssub.s32 128, 128
      %2256 = vsyncadd [#allocation6], %s2255
      %s2258 = sshll.u32 [#allocation7], 4
      %s2259 = int_to_ptr.vmem [resolvable:$true] %s2258
      %2261 = dma.vmem_to_hbm [thread:$0]  %s2259, 128, %s4, [#allocation6]
    $region25: #{tpu_custom_call.1} parent=1 // pred_fallthru
      _
    // Predicated region
    $region26: #{tpu_custom_call.1} parent=1 // pred_check
      _
    $region27: #{tpu_custom_call.1} parent=1 // pred_check_branch
      %2263 = sbr.rel (0) target = $region29
    $region28: #{tpu_custom_call.1} parent=1 // pred_region
      %2264 = dma.done [#allocation6], 128
    $region29: #{tpu_custom_call.1} parent=1 // pred_fallthru
      _
    %2265 = vsyncpa [#allocation5], 1
    %2266 = vsyncpa [#allocation6], 1

</llo_original>
